<compile_context>
chip_gen: v6e
topology: v6e:2x2x1
jax: 0.10.0
libtpu: 0.0.40
codegen_flags: <defaults>
</compile_context>

<pallas_src>
import functools

import jax
import jax.numpy as jnp
from jax import lax
from jax.experimental import pallas as pl
from jax.experimental.pallas import tpu as pltpu

HIDDEN = 128  # fixed by the module: nn.Linear(num_features, 128) -> nn.Linear(128, 1)


def _discriminator_kernel(x_ref, w1_ref, b1_ref, w2_ref, b2_ref, out_ref, *, precision):
    # x_ref:   (TB, F)   VMEM  (f32 or bf16; tail rows of a partial last block are garbage,
    #                           which only pollutes output columns >= B -- sliced off outside)
    # w1_ref:  (128, F)  VMEM  resident fc1 weight, PyTorch (out, in) layout
    # b1_ref:  (128, 1)  VMEM  f32
    # w2_ref:  (128, 1)  VMEM  f32
    # b2_ref:  (1, 1)    SMEM  f32 scalar
    # out_ref: (1, TB)   VMEM  f32 lane-dense output slab

    # Layer 1 on the MXU, computed transposed: hT[h, b] = sum_f w1[h, f] * x[b, f]
    h_t = lax.dot_general(
        w1_ref[...],
        x_ref[...],
        dimension_numbers=(((1,), (1,)), ((), ())),
        precision=precision,
        preferred_element_type=jnp.float32,
    )  # (128, TB), f32 accumulation
    h_t = jnp.maximum(h_t + b1_ref[...], 0.0)  # bias (lane-broadcast) + ReLU on the VPU

    # Layer 2 (128 -> 1): VPU multiply + sublane reduce -> lane-dense (1, TB) slab.
    y = jnp.sum(h_t * w2_ref[...], axis=0, keepdims=True) + b2_ref[0, 0]
    out_ref[...] = y.astype(out_ref.dtype)


@functools.lru_cache(maxsize=1)
def _vmem_budget_bytes():
    """Per-generation scoped-VMEM budget (96 MiB on 128-MiB parts, <=48 MiB on 64-MiB parts)."""
    try:
        info = pltpu.get_tpu_info()
        phys = None
        for attr in ("vmem_capacity_bytes", "vmem_bytes", "vmem_size_bytes"):
            if hasattr(info, attr):
                phys = int(getattr(info, attr))
                break
        if not phys:
            return 32 * 1024 * 1024
    except Exception:
        return 32 * 1024 * 1024
    if phys >= 100 * 1024 * 1024:       # 128-MiB class: v5e / v6e
        return 96 * 1024 * 1024
    return min(48 * 1024 * 1024, (phys * 3) // 4)   # 64-MiB class: v7x per-TensorCore


def _pick_tile(b_rows, feat, x_itemsize, w_itemsize, vmem_limit):
    """Pick a batch tile (multiple of 128 rows) targeting a multi-MiB x block."""
    H = HIDDEN
    target_tile_bytes = 6 * 1024 * 1024              # 4-8 MiB: near the HBM-roofline plateau
    tb = (target_tile_bytes // max(1, feat * x_itemsize)) // 128 * 128
    tb = max(128, min(tb, 8192))                      # cap keeps the f32 (H, tb) epilogue modest
    tb = min(tb, pl.cdiv(b_rows, 128) * 128)          # never wider than the (rounded) batch
    # Give the "parallel" batch axis >= 2 grid steps when the batch allows it, so v7x can
    # shard steps across its two TensorCores.
    if b_rows > 128 and pl.cdiv(b_rows, tb) < 2:
        tb = max(128, pl.cdiv(pl.cdiv(b_rows, 2), 128) * 128)

    def fits(t):
        x_buf = 2 * t * feat * x_itemsize             # double-buffered x stream
        w_buf = 2 * H * feat * w_itemsize + 4 * H * 4  # resident weights (conservative 2x)
        o_buf = 2 * t * 4                             # double-buffered (1, tb) output
        epi = H * t * 4                               # f32 h_t intermediate (may spill to VMEM)
        return x_buf + w_buf + o_buf + epi <= int(vmem_limit * 0.8)

    while tb > 128 and not fits(tb):
        tb -= 128
    return tb, pl.cdiv(b_rows, tb)


@functools.lru_cache(maxsize=None)
def _build_forward(b_rows, feat, tb, num_tiles, x_itemsize, w_itemsize,
                   vmem_limit, use_highest, resident_vmem):
    H = HIDDEN
    b_pad = num_tiles * tb
    precision = lax.Precision.HIGHEST if use_highest else None
    kernel = functools.partial(_discriminator_kernel, precision=precision)

    if resident_vmem:
        # Un-blocked VMEM operands: fetched once, kept as a single resident copy.
        w_specs = [
            pl.BlockSpec(memory_space=pltpu.MemorySpace.VMEM),
            pl.BlockSpec(memory_space=pltpu.MemorySpace.VMEM),
            pl.BlockSpec(memory_space=pltpu.MemorySpace.VMEM),
        ]
    else:
        # Fallback: blocked specs with constant index_map (pipeliner re-uses the block).
        w_specs = [
            pl.BlockSpec((H, feat), lambda i: (0, 0)),
            pl.BlockSpec((H, 1), lambda i: (0, 0)),
            pl.BlockSpec((H, 1), lambda i: (0, 0)),
        ]

    cost = pl.CostEstimate(
        flops=2 * b_pad * feat * H + 4 * b_pad * H,
        transcendentals=0,
        bytes_accessed=(b_rows * feat * x_itemsize      # x, at its actual HBM dtype
                        + H * feat * w_itemsize         # resident fc1 weight
                        + (2 * H + 1) * 4               # b1, w2, b2
                        + b_pad * 4),                   # output slab
    )

    call = pl.pallas_call(
        kernel,
        out_shape=jax.ShapeDtypeStruct((1, b_pad), jnp.float32),
        grid=(num_tiles,),
        in_specs=[
            pl.BlockSpec((tb, feat), lambda i: (i, 0)),   # x: new row tile per grid step
            *w_specs,                                     # w1, b1, w2: resident in VMEM
            pl.BlockSpec(memory_space=pltpu.SMEM),        # b2: scalar in SMEM
        ],
        out_specs=pl.BlockSpec((1, tb), lambda i: (0, i)),  # lane-dense output slab
        compiler_params=pltpu.CompilerParams(
            dimension_semantics=("parallel",),
            vmem_limit_bytes=int(vmem_limit),
        ),
        cost_estimate=cost,
    )
    return jax.jit(call)


_WORKING_ATTEMPT = 0  # sticky index into the fallback ladder (once something compiles, reuse it)


def discriminator_forward(x, w1, b1, w2, b2):
    """relu(x @ w1.T + b1) @ w2.T + b2, returned as (B, 1) float32.

    x:  (B, F)    f32 or bf16 (pass bf16 activations directly -- the wrapper never casts x)
    w1: (128, F)  fc1 weight, PyTorch (out_features, in_features) layout
    b1: (128,)    fc1 bias
    w2: (1, 128)  fc2 weight
    b2: (1,)      fc2 bias
    """
    global _WORKING_ATTEMPT
    B, F = x.shape
    H = HIDDEN
    assert w1.shape == (H, F) and b1.shape == (H,) and w2.shape == (1, H) and b2.shape == (1,)

    # Only the small resident fc1 weight follows the activation dtype; post-matmul math is f32.
    # x is deliberately NOT cast or padded here (a wrapper-side astype/pad would re-stream the
    # whole (B, F) array through HBM, costing more than it saves for this HBM-bound kernel).
    w1_c = jnp.asarray(w1, dtype=x.dtype)
    b1_c = jnp.asarray(b1, dtype=jnp.float32).reshape(H, 1)
    w2_c = jnp.asarray(w2, dtype=jnp.float32).reshape(H, 1)
    b2_c = jnp.asarray(b2, dtype=jnp.float32).reshape(1, 1)

    if B < 128:
        # Tiny-batch-only pad up to one full 128-row tile (a few KiB of extra traffic).
        x_in = jnp.pad(x, ((0, 128 - B), (0, 0)))
        b_rows = 128
    else:
        x_in = x
        b_rows = B

    use_highest = x.dtype == jnp.float32
    vmem_budget = _vmem_budget_bytes()
    attempts = (
        # preferred: single-copy resident weights + exact-f32 MXU + per-generation VMEM budget
        dict(resident_vmem=True, f32_highest=use_highest, vmem=vmem_budget),
        # conservative specs/precision, per-generation VMEM budget
        dict(resident_vmem=False, f32_highest=False, vmem=vmem_budget),
        # previously-validated baseline configuration
        dict(resident_vmem=False, f32_highest=False, vmem=32 * 1024 * 1024),
    )

    last_err = None
    for idx in range(_WORKING_ATTEMPT, len(attempts)):
        cfg = attempts[idx]
        tb, num_tiles = _pick_tile(b_rows, F, x.dtype.itemsize, w1_c.dtype.itemsize, cfg["vmem"])
        fn = _build_forward(b_rows, F, tb, num_tiles, x.dtype.itemsize, w1_c.dtype.itemsize,
                            cfg["vmem"], cfg["f32_highest"], cfg["resident_vmem"])
        try:
            out = fn(x_in, w1_c, b1_c, w2_c, b2_c)
            _WORKING_ATTEMPT = idx
            return out[0, :B].reshape(B, 1)
        except Exception as err:  # noqa: BLE001 -- fall back to a more conservative config
            last_err = err
    raise last_err


def _reference_forward(x, w1, b1, w2, b2):
    # Same math as the PyTorch module: relu(x @ W1^T + b1) @ W2^T + b2 (f32 accumulation).
    h = jnp.dot(x, w1.T, precision=lax.Precision.HIGHEST,
                preferred_element_type=jnp.float32) + b1
    h = jnp.maximum(h, 0.0)
    return jnp.sum(h * w2[0], axis=-1, keepdims=True) + b2


if __name__ == "__main__":
    key = jax.random.PRNGKey(0)
    B, F, H = 8, 32, HIDDEN

    k_x, k_w1, k_b1, k_w2, k_b2 = jax.random.split(key, 5)
    x = jax.random.normal(k_x, (B, F), dtype=jnp.float32)

    # PyTorch nn.Linear-style init, stored in PyTorch (out_features, in_features) layout.
    bound1 = 1.0 / jnp.sqrt(F)
    w1 = jax.random.uniform(k_w1, (H, F), minval=-bound1, maxval=bound1, dtype=jnp.float32)
    b1 = jax.random.uniform(k_b1, (H,), minval=-bound1, maxval=bound1, dtype=jnp.float32)
    bound2 = 1.0 / jnp.sqrt(H)
    w2 = jax.random.uniform(k_w2, (1, H), minval=-bound2, maxval=bound2, dtype=jnp.float32)
    b2 = jax.random.uniform(k_b2, (1,), minval=-bound2, maxval=bound2, dtype=jnp.float32)

    # 1) f32 path, tiny batch (single grid step).
    out = discriminator_forward(x, w1, b1, w2, b2)
    jax.block_until_ready(out)
    ref = _reference_forward(x, w1, b1, w2, b2)
    assert out.shape == (B, 1)
    assert jnp.allclose(out, ref, atol=5e-3, rtol=5e-3)

    # 2) f32 path, ragged multi-tile batch (no wrapper-side padding: last block is partial).
    B2 = 260
    x2 = jax.random.normal(jax.random.PRNGKey(1), (B2, F), dtype=jnp.float32)
    out2 = discriminator_forward(x2, w1, b1, w2, b2)
    jax.block_until_ready(out2)
    ref2 = _reference_forward(x2, w1, b1, w2, b2)
    assert out2.shape == (B2, 1)
    assert jnp.allclose(out2, ref2, atol=5e-3, rtol=5e-3)

    # 3) bf16 activations provided by the caller (halves x DMA bytes; f32 accumulation kept).
    x2_bf = x2.astype(jnp.bfloat16)
    out_bf = discriminator_forward(x2_bf, w1, b1, w2, b2)
    jax.block_until_ready(out_bf)
    ref_bf = _reference_forward(x2_bf, w1.astype(jnp.bfloat16), b1, w2, b2)
    assert out_bf.shape == (B2, 1)
    assert jnp.allclose(out_bf, ref_bf, atol=5e-3, rtol=5e-3)

    print("KERNEL_OK")
</pallas_src>

<mosaic_0001>
module attributes {stable_mosaic.version = 11 : i64} {
  func.func @_discriminator_kernel(%arg0: i32, %arg1: memref<128x32xf32, #tpu.memory_space<vmem>>, %arg2: memref<128x32xf32, #tpu.memory_space<vmem>>, %arg3: memref<128x1xf32, #tpu.memory_space<vmem>>, %arg4: memref<128x1xf32, #tpu.memory_space<vmem>>, %arg5: memref<1x1xf32, #tpu.memory_space<smem>>, %arg6: memref<1x128xf32, #tpu.memory_space<vmem>>) attributes {dimension_semantics = [#tpu.dimension_semantics<parallel>], iteration_bounds = array<i64: 1>, scalar_prefetch = 0 : i64, scratch_operands = 0 : i64, tpu.core_type = #tpu.core_type<tc>, window_params = [{transform_indices = @transform_0, window_bounds = array<i64: 128, 32>}, {pipeline_mode = #tpu.pipeline_mode<synchronous>, transform_indices = @transform_1, window_bounds = array<i64: 128, 32>}, {pipeline_mode = #tpu.pipeline_mode<synchronous>, transform_indices = @transform_2, window_bounds = array<i64: 128, 1>}, {pipeline_mode = #tpu.pipeline_mode<synchronous>, transform_indices = @transform_3, window_bounds = array<i64: 128, 1>}, {transform_indices = @transform_4, window_bounds = array<i64: 1, 1>}, {transform_indices = @transform_5, window_bounds = array<i64: 1, 128>}]} {
    %c0 = arith.constant 0 : index
    %c0_0 = arith.constant 0 : index
    %0 = vector.load %arg2[%c0, %c0_0] : memref<128x32xf32, #tpu.memory_space<vmem>>, vector<128x32xf32>
    %c0_1 = arith.constant 0 : index
    %c0_2 = arith.constant 0 : index
    %1 = vector.load %arg1[%c0_1, %c0_2] : memref<128x32xf32, #tpu.memory_space<vmem>>, vector<128x32xf32>
    %cst = arith.constant dense<0.000000e+00> : vector<128x128xf32>
    %2 = tpu.matmul %0, %1, %cst {dimension_numbers = #tpu.dot_dimension_numbers<[1], [1], [0], [0], [0, 0, 1, 0], [], []>, precision = #tpu.contract_precision<fp32>} : vector<128x32xf32>, vector<128x32xf32>, vector<128x128xf32> -> vector<128x128xf32>
    %c0_3 = arith.constant 0 : index
    %c0_4 = arith.constant 0 : index
    %3 = vector.load %arg3[%c0_3, %c0_4] : memref<128x1xf32, #tpu.memory_space<vmem>>, vector<128x1xf32>
    %4 = vector.broadcast %3 : vector<128x1xf32> to vector<128x128xf32>
    %5 = arith.addf %2, %4 : vector<128x128xf32>
    %cst_5 = arith.constant 0.000000e+00 : f32
    %6 = vector.broadcast %cst_5 : f32 to vector<128x128xf32>
    %7 = arith.maximumf %5, %6 : vector<128x128xf32>
    %c0_6 = arith.constant 0 : index
    %c0_7 = arith.constant 0 : index
    %8 = vector.load %arg4[%c0_6, %c0_7] : memref<128x1xf32, #tpu.memory_space<vmem>>, vector<128x1xf32>
    %9 = vector.broadcast %8 : vector<128x1xf32> to vector<128x128xf32>
    %10 = arith.mulf %7, %9 : vector<128x128xf32>
    %cst_8 = arith.constant dense<0.000000e+00> : vector<128xf32>
    %11 = vector.multi_reduction <add>, %10, %cst_8 [0] : vector<128x128xf32> to vector<128xf32>
    %12 = vector.shape_cast %11 : vector<128xf32> to vector<1x128xf32>
    %c0_9 = arith.constant 0 : index
    %c0_10 = arith.constant 0 : index
    %13 = memref.load %arg5[%c0_9, %c0_10] : memref<1x1xf32, #tpu.memory_space<smem>>
    %14 = vector.broadcast %13 : f32 to vector<1x128xf32>
    %15 = arith.addf %12, %14 : vector<1x128xf32>
    %c0_11 = arith.constant 0 : index
    %c0_12 = arith.constant 0 : index
    %16 = vector.load %arg6[%c0_11, %c0_12] : memref<1x128xf32, #tpu.memory_space<vmem>>, vector<1x128xf32>
    tpu.vector_store %arg6[%c0_11, %c0_12], %15 {strides = array<i32>} : memref<1x128xf32, #tpu.memory_space<vmem>>, vector<1x128xf32>,
    return
  }
  func.func @transform_0(%arg0: i32) -> (i32, i32) {
    %c0_i32 = arith.constant 0 : i32
    %c0_i32_0 = arith.constant 0 : i32
    return %arg0, %c0_i32 : i32, i32
  }
  func.func @transform_1(%arg0: i32) -> (i32, i32) {
    %c0_i32 = arith.constant 0 : i32
    %c0_i32_0 = arith.constant 0 : i32
    %c0_i32_1 = arith.constant 0 : i32
    return %c0_i32, %c0_i32_0 : i32, i32
  }
  func.func @transform_2(%arg0: i32) -> (i32, i32) {
    %c0_i32 = arith.constant 0 : i32
    %c0_i32_0 = arith.constant 0 : i32
    %c0_i32_1 = arith.constant 0 : i32
    return %c0_i32, %c0_i32_0 : i32, i32
  }
  func.func @transform_3(%arg0: i32) -> (i32, i32) {
    %c0_i32 = arith.constant 0 : i32
    %c0_i32_0 = arith.constant 0 : i32
    %c0_i32_1 = arith.constant 0 : i32
    return %c0_i32, %c0_i32_0 : i32, i32
  }
  func.func @transform_4(%arg0: i32) -> (i32, i32) {
    %c0_i32 = arith.constant 0 : i32
    %c0_i32_0 = arith.constant 0 : i32
    %c0_i32_1 = arith.constant 0 : i32
    return %c0_i32, %c0_i32_0 : i32, i32
  }
  func.func @transform_5(%arg0: i32) -> (i32, i32) {
    %c0_i32 = arith.constant 0 : i32
    %c0_i32_0 = arith.constant 0 : i32
    return %c0_i32, %arg0 : i32, i32
  }
}

module attributes {stable_mosaic.version = 11 : i64} {
  func.func @_discriminator_kernel(%arg0: i32, %arg1: memref<128x32xf32, #tpu.memory_space<vmem>>, %arg2: memref<128x32xf32, #tpu.memory_space<vmem>>, %arg3: memref<128x1xf32, #tpu.memory_space<vmem>>, %arg4: memref<128x1xf32, #tpu.memory_space<vmem>>, %arg5: memref<1x1xf32, #tpu.memory_space<smem>>, %arg6: memref<1x128xf32, #tpu.memory_space<vmem>>) attributes {dimension_semantics = [#tpu.dimension_semantics<parallel>], iteration_bounds = array<i64: 1>, scalar_prefetch = 0 : i64, scratch_operands = 0 : i64, tpu.core_type = #tpu.core_type<tc>, window_params = [{transform_indices = @transform_0, window_bounds = array<i64: 128, 32>}, {pipeline_mode = #tpu.pipeline_mode<synchronous>, transform_indices = @transform_1, window_bounds = array<i64: 128, 32>}, {pipeline_mode = #tpu.pipeline_mode<synchronous>, transform_indices = @transform_2, window_bounds = array<i64: 128, 1>}, {pipeline_mode = #tpu.pipeline_mode<synchronous>, transform_indices = @transform_3, window_bounds = array<i64: 128, 1>}, {transform_indices = @transform_4, window_bounds = array<i64: 1, 1>}, {transform_indices = @transform_5, window_bounds = array<i64: 1, 128>}]} {
    %c0 = arith.constant 0 : index
    %c0_0 = arith.constant 0 : index
    %0 = vector.load %arg2[%c0, %c0_0] : memref<128x32xf32, #tpu.memory_space<vmem>>, vector<128x32xf32>
    %c0_1 = arith.constant 0 : index
    %c0_2 = arith.constant 0 : index
    %1 = vector.load %arg1[%c0_1, %c0_2] : memref<128x32xf32, #tpu.memory_space<vmem>>, vector<128x32xf32>
    %cst = arith.constant dense<0.000000e+00> : vector<128x128xf32>
    %2 = tpu.matmul %0, %1, %cst {dimension_numbers = #tpu.dot_dimension_numbers<[1], [1], [0], [0], [0, 0, 1, 0], [], []>} : vector<128x32xf32>, vector<128x32xf32>, vector<128x128xf32> -> vector<128x128xf32>
    %c0_3 = arith.constant 0 : index
    %c0_4 = arith.constant 0 : index
    %3 = vector.load %arg3[%c0_3, %c0_4] : memref<128x1xf32, #tpu.memory_space<vmem>>, vector<128x1xf32>
    %4 = vector.broadcast %3 : vector<128x1xf32> to vector<128x128xf32>
    %5 = arith.addf %2, %4 : vector<128x128xf32>
    %cst_5 = arith.constant 0.000000e+00 : f32
    %6 = vector.broadcast %cst_5 : f32 to vector<128x128xf32>
    %7 = arith.maximumf %5, %6 : vector<128x128xf32>
    %c0_6 = arith.constant 0 : index
    %c0_7 = arith.constant 0 : index
    %8 = vector.load %arg4[%c0_6, %c0_7] : memref<128x1xf32, #tpu.memory_space<vmem>>, vector<128x1xf32>
    %9 = vector.broadcast %8 : vector<128x1xf32> to vector<128x128xf32>
    %10 = arith.mulf %7, %9 : vector<128x128xf32>
    %cst_8 = arith.constant dense<0.000000e+00> : vector<128xf32>
    %11 = vector.multi_reduction <add>, %10, %cst_8 [0] : vector<128x128xf32> to vector<128xf32>
    %12 = vector.shape_cast %11 : vector<128xf32> to vector<1x128xf32>
    %c0_9 = arith.constant 0 : index
    %c0_10 = arith.constant 0 : index
    %13 = memref.load %arg5[%c0_9, %c0_10] : memref<1x1xf32, #tpu.memory_space<smem>>
    %14 = vector.broadcast %13 : f32 to vector<1x128xf32>
    %15 = arith.addf %12, %14 : vector<1x128xf32>
    %c0_11 = arith.constant 0 : index
    %c0_12 = arith.constant 0 : index
    %16 = vector.load %arg6[%c0_11, %c0_12] : memref<1x128xf32, #tpu.memory_space<vmem>>, vector<1x128xf32>
    tpu.vector_store %arg6[%c0_11, %c0_12], %15 {strides = array<i32>} : memref<1x128xf32, #tpu.memory_space<vmem>>, vector<1x128xf32>,
    return
  }
  func.func @transform_0(%arg0: i32) -> (i32, i32) {
    %c0_i32 = arith.constant 0 : i32
    %c0_i32_0 = arith.constant 0 : i32
    return %arg0, %c0_i32 : i32, i32
  }
  func.func @transform_1(%arg0: i32) -> (i32, i32) {
    %c0_i32 = arith.constant 0 : i32
    %c0_i32_0 = arith.constant 0 : i32
    %c0_i32_1 = arith.constant 0 : i32
    return %c0_i32, %c0_i32_0 : i32, i32
  }
  func.func @transform_2(%arg0: i32) -> (i32, i32) {
    %c0_i32 = arith.constant 0 : i32
    %c0_i32_0 = arith.constant 0 : i32
    %c0_i32_1 = arith.constant 0 : i32
    return %c0_i32, %c0_i32_0 : i32, i32
  }
  func.func @transform_3(%arg0: i32) -> (i32, i32) {
    %c0_i32 = arith.constant 0 : i32
    %c0_i32_0 = arith.constant 0 : i32
    %c0_i32_1 = arith.constant 0 : i32
    return %c0_i32, %c0_i32_0 : i32, i32
  }
  func.func @transform_4(%arg0: i32) -> (i32, i32) {
    %c0_i32 = arith.constant 0 : i32
    %c0_i32_0 = arith.constant 0 : i32
    %c0_i32_1 = arith.constant 0 : i32
    return %c0_i32, %c0_i32_0 : i32, i32
  }
  func.func @transform_5(%arg0: i32) -> (i32, i32) {
    %c0_i32 = arith.constant 0 : i32
    %c0_i32_0 = arith.constant 0 : i32
    return %c0_i32, %arg0 : i32, i32
  }
}

</mosaic_0001>

<llo_original>
// kernel: tpu_custom_call.1
$region0: #{tpu_custom_call.1}
  #allocation0 [shape = 'u32[]', space=smem, size = 0x4, offset = 0x4, fixed_abs, tag = 'smem constant byte address 0x4 - core index']
  #allocation1 [shape = 'u32[144,128]{1,0:T(1,128)}', space=vmem, size = 0x12000, scoped, tag = 'internal scratch']
  #allocation2 [shape = 'f32[1,1]{1,0:T(1,128)S(6)}', space=smem, size = 0x200, scoped, tag = 'scoped memory for tpu_custom_call.1']
  %s0 = inlined_call_operand.vmem [shape: f32[128,32], index: 0, kind: input, shape index: {}]
  %s1 = inlined_call_operand.vmem [shape: f32[128,32], index: 1, kind: input, shape index: {}]
  %s2 = inlined_call_operand.vmem [shape: f32[128,1], index: 2, kind: input, shape index: {}]
  %s3 = inlined_call_operand.vmem [shape: f32[128,1], index: 3, kind: input, shape index: {}]
  %s4 = inlined_call_operand.<no memory space> [shape: f32[1,1], index: 4, kind: input, shape index: {}]
  %s5 = inlined_call_operand.hbm [shape: f32[1,128], index: 5, kind: output, shape index: {}]
  %s6 = sld [smem:[#allocation0]]
  $region30: #{tpu_custom_call.1} parent=0
    _
  %s8 = ssub.s32 1, %s6
  %s9 = scalar_select 0, %s8, %s6
  %10 = sst [smem:[#allocation2]] %s4
  $region1: #{tpu_custom_call.1} parent=0
    #allocation3 [shape = 'u8[512]{0}', space=vmem, size = 0x400, scoped, tag = 'output window, operand 0, single buffered']
    #allocation4 [shape = 's32[1]{0}', space=sflag, size = 0x4, scoped, tag = 'scoped memory for tpu_custom_call.1']
    %11 = vsyncpa [#allocation4], 0
    // Predicated region
    $region2: #{tpu_custom_call.1} parent=1 // pred_check
      _
    $region3: #{tpu_custom_call.1} parent=1 // pred_check_branch
      %13 = sbr.rel (0) target = $region5
    $region4: #{tpu_custom_call.1} parent=1 // pred_region
      _
    $region5: #{tpu_custom_call.1} parent=1 // pred_fallthru
      _
    // Predicated region
    $region6: #{tpu_custom_call.1} parent=1 // pred_check
      _
    $region7: #{tpu_custom_call.1} parent=1 // pred_check_branch
      %15 = sbr.rel (0) target = $region9
    $region8: #{tpu_custom_call.1} parent=1 // pred_region
      _
    $region9: #{tpu_custom_call.1} parent=1 // pred_fallthru
      _
    // Predicated region
    $region10: #{tpu_custom_call.1} parent=1 // pred_check
      _
    $region11: #{tpu_custom_call.1} parent=1 // pred_check_branch
      %17 = sbr.rel (0) target = $region13
    $region12: #{tpu_custom_call.1} parent=1 // pred_region
      _
    $region13: #{tpu_custom_call.1} parent=1 // pred_fallthru
      _
    // Predicated region
    $region14: #{tpu_custom_call.1} parent=1 // pred_check
      _
    $region15: #{tpu_custom_call.1} parent=1 // pred_check_branch
      %19 = sbr.rel (0) target = $region17
    $region16: #{tpu_custom_call.1} parent=1 // pred_region
      _
    $region17: #{tpu_custom_call.1} parent=1 // pred_fallthru
      _
    // Predicated region
    $region18: #{tpu_custom_call.1} parent=1 // pred_check
      _
    $region19: #{tpu_custom_call.1} parent=1 // pred_check_branch
      %21 = sbr.rel (0) target = $region21
    $region20: #{tpu_custom_call.1} parent=1 // pred_region
      _
    $region21: #{tpu_custom_call.1} parent=1 // pred_fallthru
      _
    %v22 = vld [vmem:[%s1] sm:$0xff]
    %v23 = vld [vmem:[%s1 + $0x8] sm:$0xff]
    %v24 = vld [vmem:[%s1 + $0x10] sm:$0xff]
    %v25 = vld [vmem:[%s1 + $0x18] sm:$0xff]
    %v26 = vld [vmem:[%s1 + $0x20] sm:$0xff]
    %v27 = vld [vmem:[%s1 + $0x28] sm:$0xff]
    %v28 = vld [vmem:[%s1 + $0x30] sm:$0xff]
    %v29 = vld [vmem:[%s1 + $0x38] sm:$0xff]
    %v30 = vld [vmem:[%s1 + $0x40] sm:$0xff]
    %v31 = vld [vmem:[%s1 + $0x48] sm:$0xff]
    %v32 = vld [vmem:[%s1 + $0x50] sm:$0xff]
    %v33 = vld [vmem:[%s1 + $0x58] sm:$0xff]
    %v34 = vld [vmem:[%s1 + $0x60] sm:$0xff]
    %v35 = vld [vmem:[%s1 + $0x68] sm:$0xff]
    %v36 = vld [vmem:[%s1 + $0x70] sm:$0xff]
    %v37 = vld [vmem:[%s1 + $0x78] sm:$0xff]
    %v38 = vld [vmem:[%s0] sm:$0xff]
    %v39 = vld [vmem:[%s0 + $0x8] sm:$0xff]
    %v40 = vld [vmem:[%s0 + $0x10] sm:$0xff]
    %v41 = vld [vmem:[%s0 + $0x18] sm:$0xff]
    %v42 = vld [vmem:[%s0 + $0x20] sm:$0xff]
    %v43 = vld [vmem:[%s0 + $0x28] sm:$0xff]
    %v44 = vld [vmem:[%s0 + $0x30] sm:$0xff]
    %v45 = vld [vmem:[%s0 + $0x38] sm:$0xff]
    %v46 = vld [vmem:[%s0 + $0x40] sm:$0xff]
    %v47 = vld [vmem:[%s0 + $0x48] sm:$0xff]
    %v48 = vld [vmem:[%s0 + $0x50] sm:$0xff]
    %v49 = vld [vmem:[%s0 + $0x58] sm:$0xff]
    %v50 = vld [vmem:[%s0 + $0x60] sm:$0xff]
    %v51 = vld [vmem:[%s0 + $0x68] sm:$0xff]
    %v52 = vld [vmem:[%s0 + $0x70] sm:$0xff]
    %v53 = vld [vmem:[%s0 + $0x78] sm:$0xff]
    %v54 = vld [vmem:[%s2] sm:$0xff]
    %v55 = vld [vmem:[%s2 + $0x8] sm:$0xff]
    %v56 = vld [vmem:[%s2 + $0x10] sm:$0xff]
    %v57 = vld [vmem:[%s2 + $0x18] sm:$0xff]
    %v58 = vld [vmem:[%s2 + $0x20] sm:$0xff]
    %v59 = vld [vmem:[%s2 + $0x28] sm:$0xff]
    %v60 = vld [vmem:[%s2 + $0x30] sm:$0xff]
    %v61 = vld [vmem:[%s2 + $0x38] sm:$0xff]
    %v62 = vld [vmem:[%s2 + $0x40] sm:$0xff]
    %v63 = vld [vmem:[%s2 + $0x48] sm:$0xff]
    %v64 = vld [vmem:[%s2 + $0x50] sm:$0xff]
    %v65 = vld [vmem:[%s2 + $0x58] sm:$0xff]
    %v66 = vld [vmem:[%s2 + $0x60] sm:$0xff]
    %v67 = vld [vmem:[%s2 + $0x68] sm:$0xff]
    %v68 = vld [vmem:[%s2 + $0x70] sm:$0xff]
    %v69 = vld [vmem:[%s2 + $0x78] sm:$0xff]
    %71 = vset.pattern.permute.xlu0 0
    %72 = vperm.xlu0 %71, %v54
    %v73 = vpop.permute.xlu0 %72
    %76 = vset.pattern.permute.xlu0 0
    %77 = vperm.xlu0 %76, %v55
    %v78 = vpop.permute.xlu0 %77
    %81 = vset.pattern.permute.xlu0 0
    %82 = vperm.xlu0 %81, %v56
    %v83 = vpop.permute.xlu0 %82
    %86 = vset.pattern.permute.xlu0 0
    %87 = vperm.xlu0 %86, %v57
    %v88 = vpop.permute.xlu0 %87
    %91 = vset.pattern.permute.xlu0 0
    %92 = vperm.xlu0 %91, %v58
    %v93 = vpop.permute.xlu0 %92
    %96 = vset.pattern.permute.xlu0 0
    %97 = vperm.xlu0 %96, %v59
    %v98 = vpop.permute.xlu0 %97
    %101 = vset.pattern.permute.xlu0 0
    %102 = vperm.xlu0 %101, %v60
    %v103 = vpop.permute.xlu0 %102
    %106 = vset.pattern.permute.xlu0 0
    %107 = vperm.xlu0 %106, %v61
    %v108 = vpop.permute.xlu0 %107
    %111 = vset.pattern.permute.xlu0 0
    %112 = vperm.xlu0 %111, %v62
    %v113 = vpop.permute.xlu0 %112
    %116 = vset.pattern.permute.xlu0 0
    %117 = vperm.xlu0 %116, %v63
    %v118 = vpop.permute.xlu0 %117
    %121 = vset.pattern.permute.xlu0 0
    %122 = vperm.xlu0 %121, %v64
    %v123 = vpop.permute.xlu0 %122
    %126 = vset.pattern.permute.xlu0 0
    %127 = vperm.xlu0 %126, %v65
    %v128 = vpop.permute.xlu0 %127
    %131 = vset.pattern.permute.xlu0 0
    %132 = vperm.xlu0 %131, %v66
    %v133 = vpop.permute.xlu0 %132
    %136 = vset.pattern.permute.xlu0 0
    %137 = vperm.xlu0 %136, %v67
    %v138 = vpop.permute.xlu0 %137
    %141 = vset.pattern.permute.xlu0 0
    %142 = vperm.xlu0 %141, %v68
    %v143 = vpop.permute.xlu0 %142
    %146 = vset.pattern.permute.xlu0 0
    %147 = vperm.xlu0 %146, %v69
    %v148 = vpop.permute.xlu0 %147
    %vm150 = vcmask 261120
    %v152 = vsel %vm150, %v22, 0
    %v155 = vsel %vm150, %v23, 0
    %v158 = vsel %vm150, %v24, 0
    %v161 = vsel %vm150, %v25, 0
    %v164 = vsel %vm150, %v26, 0
    %v167 = vsel %vm150, %v27, 0
    %v170 = vsel %vm150, %v28, 0
    %v173 = vsel %vm150, %v29, 0
    %v176 = vsel %vm150, %v30, 0
    %v179 = vsel %vm150, %v31, 0
    %v182 = vsel %vm150, %v32, 0
    %v185 = vsel %vm150, %v33, 0
    %v188 = vsel %vm150, %v34, 0
    %v191 = vsel %vm150, %v35, 0
    %v194 = vsel %vm150, %v36, 0
    %v197 = vsel %vm150, %v37, 0
    %v200 = vsel %vm150, %v38, 0
    %v203 = vsel %vm150, %v39, 0
    %v206 = vsel %vm150, %v40, 0
    %v209 = vsel %vm150, %v41, 0
    %v212 = vsel %vm150, %v42, 0
    %v215 = vsel %vm150, %v43, 0
    %v218 = vsel %vm150, %v44, 0
    %v221 = vsel %vm150, %v45, 0
    %v224 = vsel %vm150, %v46, 0
    %v227 = vsel %vm150, %v47, 0
    %v230 = vsel %vm150, %v48, 0
    %v233 = vsel %vm150, %v49, 0
    %v236 = vsel %vm150, %v50, 0
    %v239 = vsel %vm150, %v51, 0
    %v242 = vsel %vm150, %v52, 0
    %v245 = vsel %vm150, %v53, 0
    %247 = vmatprep.subr.mxu0 0.0
    %v248 = vand.u32 %v245, 4294901760
    %249 = vmatpush1.xpose.msra.mxu0 %v248
    %250 = vmatprep.subr.mxu0 0.0
    %v251 = vand.u32 %v242, 4294901760
    %252 = vmatpush1.xpose.msra.mxu0 %v251
    %253 = vmatprep.subr.mxu0 0.0
    %v254 = vand.u32 %v239, 4294901760
    %255 = vmatpush1.xpose.msra.mxu0 %v254
    %256 = vmatprep.subr.mxu0 0.0
    %v257 = vand.u32 %v236, 4294901760
    %258 = vmatpush1.xpose.msra.mxu0 %v257
    %259 = vmatprep.subr.mxu0 0.0
    %v260 = vand.u32 %v233, 4294901760
    %261 = vmatpush1.xpose.msra.mxu0 %v260
    %262 = vmatprep.subr.mxu0 0.0
    %v263 = vand.u32 %v230, 4294901760
    %264 = vmatpush1.xpose.msra.mxu0 %v263
    %265 = vmatprep.subr.mxu0 0.0
    %v266 = vand.u32 %v227, 4294901760
    %267 = vmatpush1.xpose.msra.mxu0 %v266
    %268 = vmatprep.subr.mxu0 0.0
    %v269 = vand.u32 %v224, 4294901760
    %270 = vmatpush1.xpose.msra.mxu0 %v269
    %271 = vmatprep.subr.mxu0 0.0
    %v272 = vand.u32 %v221, 4294901760
    %273 = vmatpush1.xpose.msra.mxu0 %v272
    %274 = vmatprep.subr.mxu0 0.0
    %v275 = vand.u32 %v218, 4294901760
    %276 = vmatpush1.xpose.msra.mxu0 %v275
    %277 = vmatprep.subr.mxu0 0.0
    %v278 = vand.u32 %v215, 4294901760
    %279 = vmatpush1.xpose.msra.mxu0 %v278
    %280 = vmatprep.subr.mxu0 0.0
    %v281 = vand.u32 %v212, 4294901760
    %282 = vmatpush1.xpose.msra.mxu0 %v281
    %283 = vmatprep.subr.mxu0 0.0
    %v284 = vand.u32 %v209, 4294901760
    %285 = vmatpush1.xpose.msra.mxu0 %v284
    %286 = vmatprep.subr.mxu0 0.0
    %v287 = vand.u32 %v206, 4294901760
    %288 = vmatpush1.xpose.msra.mxu0 %v287
    %289 = vmatprep.subr.mxu0 0.0
    %v290 = vand.u32 %v203, 4294901760
    %291 = vmatpush1.xpose.msra.mxu0 %v290
    %292 = vmatprep.subr.mxu0 0.0
    %v293 = vand.u32 %v200, 4294901760
    %294 = vmatpush1.xpose.msra.mxu0 %v293
    %295 = vmatprep.subr.mxu0 0.0
    %296 = vmatpush2.xpose.msra.mxu0 0.0
    %297 = vmatprep.subr.mxu0 0.0
    %298 = vmatpush2.xpose.msra.mxu0 0.0
    %299 = vmatprep.subr.mxu0 0.0
    %300 = vmatpush2.xpose.msra.mxu0 0.0
    %301 = vmatprep.subr.mxu0 0.0
    %302 = vmatpush2.xpose.msra.mxu0 0.0
    %303 = vmatprep.subr.mxu0 0.0
    %304 = vmatpush2.xpose.msra.mxu0 0.0
    %305 = vmatprep.subr.mxu0 0.0
    %306 = vmatpush2.xpose.msra.mxu0 0.0
    %307 = vmatprep.subr.mxu0 0.0
    %308 = vmatpush2.xpose.msra.mxu0 0.0
    %309 = vmatprep.subr.mxu0 0.0
    %310 = vmatpush2.xpose.msra.mxu0 0.0
    %311 = vmatprep.subr.mxu0 0.0
    %312 = vmatpush2.xpose.msra.mxu0 0.0
    %313 = vmatprep.subr.mxu0 0.0
    %314 = vmatpush2.xpose.msra.mxu0 0.0
    %315 = vmatprep.subr.mxu0 0.0
    %316 = vmatpush2.xpose.msra.mxu0 0.0
    %317 = vmatprep.subr.mxu0 0.0
    %318 = vmatpush2.xpose.msra.mxu0 0.0
    %319 = vmatprep.subr.mxu0 0.0
    %320 = vmatpush2.xpose.msra.mxu0 0.0
    %321 = vmatprep.subr.mxu0 0.0
    %322 = vmatpush2.xpose.msra.mxu0 0.0
    %323 = vmatprep.subr.mxu0 0.0
    %324 = vmatpush2.xpose.msra.mxu0 0.0
    %325 = vmatprep.subr.mxu0 0.0
    %326 = vmatpush2.xpose.msra.mxu0 0.0
    %327 = vmatprep.mubr.f32.mxu0 0.0
    %v328 = vand.u32 %v152, 4294901760
    %v329 = vsub.f32 %v152, %v328
    %v330 = vand.u32 %v329, 4294901760
    %v331 = vsub.f32 %v329, %v330
    %v332 = vand.u32 %v331, 4294901760
    %333 = vmatmul.mubr.f32.gmra.mxu0 %v332
    %v334 = vpop.f32.mrf.mxu0
    %v335 = vadd.f32 %v73, %v334
    %v336 = vpop.f32.mrf.mxu0
    %337 = vmatprep.mubr.f32.mxu0 0.0
    %v338 = vand.u32 %v155, 4294901760
    %v339 = vsub.f32 %v155, %v338
    %v340 = vand.u32 %v339, 4294901760
    %v341 = vsub.f32 %v339, %v340
    %v342 = vand.u32 %v341, 4294901760
    %343 = vmatmul.mubr.f32.gmra.mxu0 %v342
    %v344 = vpop.f32.mrf.mxu0
    %v345 = vadd.f32 %v78, %v344
    %v346 = vpop.f32.mrf.mxu0
    %347 = vmatprep.mubr.f32.mxu0 0.0
    %v348 = vand.u32 %v158, 4294901760
    %v349 = vsub.f32 %v158, %v348
    %v350 = vand.u32 %v349, 4294901760
    %v351 = vsub.f32 %v349, %v350
    %v352 = vand.u32 %v351, 4294901760
    %353 = vmatmul.mubr.f32.gmra.mxu0 %v352
    %v354 = vpop.f32.mrf.mxu0
    %v355 = vadd.f32 %v83, %v354
    %v356 = vpop.f32.mrf.mxu0
    %357 = vmatprep.mubr.f32.mxu0 0.0
    %v358 = vand.u32 %v161, 4294901760
    %v359 = vsub.f32 %v161, %v358
    %v360 = vand.u32 %v359, 4294901760
    %v361 = vsub.f32 %v359, %v360
    %v362 = vand.u32 %v361, 4294901760
    %363 = vmatmul.mubr.f32.gmra.mxu0 %v362
    %v364 = vpop.f32.mrf.mxu0
    %v365 = vadd.f32 %v88, %v364
    %v366 = vpop.f32.mrf.mxu0
    %367 = vmatprep.mubr.f32.mxu0 0.0
    %v368 = vand.u32 %v164, 4294901760
    %v369 = vsub.f32 %v164, %v368
    %v370 = vand.u32 %v369, 4294901760
    %v371 = vsub.f32 %v369, %v370
    %v372 = vand.u32 %v371, 4294901760
    %373 = vmatmul.mubr.f32.gmra.mxu0 %v372
    %v374 = vpop.f32.mrf.mxu0
    %v375 = vadd.f32 %v93, %v374
    %v376 = vpop.f32.mrf.mxu0
    %377 = vmatprep.mubr.f32.mxu0 0.0
    %v378 = vand.u32 %v167, 4294901760
    %v379 = vsub.f32 %v167, %v378
    %v380 = vand.u32 %v379, 4294901760
    %v381 = vsub.f32 %v379, %v380
    %v382 = vand.u32 %v381, 4294901760
    %383 = vmatmul.mubr.f32.gmra.mxu0 %v382
    %v384 = vpop.f32.mrf.mxu0
    %v385 = vadd.f32 %v98, %v384
    %v386 = vpop.f32.mrf.mxu0
    %387 = vmatprep.mubr.f32.mxu0 0.0
    %v388 = vand.u32 %v170, 4294901760
    %v389 = vsub.f32 %v170, %v388
    %v390 = vand.u32 %v389, 4294901760
    %v391 = vsub.f32 %v389, %v390
    %v392 = vand.u32 %v391, 4294901760
    %393 = vmatmul.mubr.f32.gmra.mxu0 %v392
    %v394 = vpop.f32.mrf.mxu0
    %v395 = vadd.f32 %v103, %v394
    %v396 = vpop.f32.mrf.mxu0
    %397 = vmatprep.mubr.f32.mxu0 0.0
    %v398 = vand.u32 %v173, 4294901760
    %v399 = vsub.f32 %v173, %v398
    %v400 = vand.u32 %v399, 4294901760
    %v401 = vsub.f32 %v399, %v400
    %v402 = vand.u32 %v401, 4294901760
    %403 = vmatmul.mubr.f32.gmra.mxu0 %v402
    %v404 = vpop.f32.mrf.mxu0
    %v405 = vadd.f32 %v108, %v404
    %v406 = vpop.f32.mrf.mxu0
    %407 = vmatprep.mubr.f32.mxu0 0.0
    %v408 = vand.u32 %v176, 4294901760
    %v409 = vsub.f32 %v176, %v408
    %v410 = vand.u32 %v409, 4294901760
    %v411 = vsub.f32 %v409, %v410
    %v412 = vand.u32 %v411, 4294901760
    %413 = vmatmul.mubr.f32.gmra.mxu0 %v412
    %v414 = vpop.f32.mrf.mxu0
    %v415 = vadd.f32 %v113, %v414
    %v416 = vpop.f32.mrf.mxu0
    %417 = vmatprep.mubr.f32.mxu0 0.0
    %v418 = vand.u32 %v179, 4294901760
    %v419 = vsub.f32 %v179, %v418
    %v420 = vand.u32 %v419, 4294901760
    %v421 = vsub.f32 %v419, %v420
    %v422 = vand.u32 %v421, 4294901760
    %423 = vmatmul.mubr.f32.gmra.mxu0 %v422
    %v424 = vpop.f32.mrf.mxu0
    %v425 = vadd.f32 %v118, %v424
    %v426 = vpop.f32.mrf.mxu0
    %427 = vmatprep.mubr.f32.mxu0 0.0
    %v428 = vand.u32 %v182, 4294901760
    %v429 = vsub.f32 %v182, %v428
    %v430 = vand.u32 %v429, 4294901760
    %v431 = vsub.f32 %v429, %v430
    %v432 = vand.u32 %v431, 4294901760
    %433 = vmatmul.mubr.f32.gmra.mxu0 %v432
    %v434 = vpop.f32.mrf.mxu0
    %v435 = vadd.f32 %v123, %v434
    %v436 = vpop.f32.mrf.mxu0
    %437 = vmatprep.mubr.f32.mxu0 0.0
    %v438 = vand.u32 %v185, 4294901760
    %v439 = vsub.f32 %v185, %v438
    %v440 = vand.u32 %v439, 4294901760
    %v441 = vsub.f32 %v439, %v440
    %v442 = vand.u32 %v441, 4294901760
    %443 = vmatmul.mubr.f32.gmra.mxu0 %v442
    %v444 = vpop.f32.mrf.mxu0
    %v445 = vadd.f32 %v128, %v444
    %v446 = vpop.f32.mrf.mxu0
    %447 = vmatprep.mubr.f32.mxu0 0.0
    %v448 = vand.u32 %v188, 4294901760
    %v449 = vsub.f32 %v188, %v448
    %v450 = vand.u32 %v449, 4294901760
    %v451 = vsub.f32 %v449, %v450
    %v452 = vand.u32 %v451, 4294901760
    %453 = vmatmul.mubr.f32.gmra.mxu0 %v452
    %v454 = vpop.f32.mrf.mxu0
    %v455 = vadd.f32 %v133, %v454
    %v456 = vpop.f32.mrf.mxu0
    %457 = vmatprep.mubr.f32.mxu0 0.0
    %v458 = vand.u32 %v191, 4294901760
    %v459 = vsub.f32 %v191, %v458
    %v460 = vand.u32 %v459, 4294901760
    %v461 = vsub.f32 %v459, %v460
    %v462 = vand.u32 %v461, 4294901760
    %463 = vmatmul.mubr.f32.gmra.mxu0 %v462
    %v464 = vpop.f32.mrf.mxu0
    %v465 = vadd.f32 %v138, %v464
    %v466 = vpop.f32.mrf.mxu0
    %467 = vmatprep.mubr.f32.mxu0 0.0
    %v468 = vand.u32 %v194, 4294901760
    %v469 = vsub.f32 %v194, %v468
    %v470 = vand.u32 %v469, 4294901760
    %v471 = vsub.f32 %v469, %v470
    %v472 = vand.u32 %v471, 4294901760
    %473 = vmatmul.mubr.f32.gmra.mxu0 %v472
    %v474 = vpop.f32.mrf.mxu0
    %v475 = vadd.f32 %v143, %v474
    %v476 = vpop.f32.mrf.mxu0
    %477 = vmatprep.mubr.f32.mxu0 0.0
    %v478 = vand.u32 %v197, 4294901760
    %v479 = vsub.f32 %v197, %v478
    %v480 = vand.u32 %v479, 4294901760
    %v481 = vsub.f32 %v479, %v480
    %v482 = vand.u32 %v481, 4294901760
    %483 = vmatmul.mubr.f32.gmra.mxu0 %v482
    %v484 = vpop.f32.mrf.mxu0
    %v485 = vadd.f32 %v148, %v484
    %v486 = vpop.f32.mrf.mxu0
    %487 = vdwg.mxu0
    %488 = vmatprep.subr.mxu0 0.0
    %v489 = vand.u32 %v245, 4294901760
    %v490 = vsub.f32 %v245, %v489
    %v491 = vand.u32 %v490, 4294901760
    %v492 = vsub.f32 %v490, %v491
    %v493 = vand.u32 %v492, 4294901760
    %494 = vmatpush1.xpose.msra.mxu0 %v493
    %495 = vmatprep.subr.mxu0 0.0
    %v496 = vand.u32 %v242, 4294901760
    %v497 = vsub.f32 %v242, %v496
    %v498 = vand.u32 %v497, 4294901760
    %v499 = vsub.f32 %v497, %v498
    %v500 = vand.u32 %v499, 4294901760
    %501 = vmatpush1.xpose.msra.mxu0 %v500
    %502 = vmatprep.subr.mxu0 0.0
    %v503 = vand.u32 %v239, 4294901760
    %v504 = vsub.f32 %v239, %v503
    %v505 = vand.u32 %v504, 4294901760
    %v506 = vsub.f32 %v504, %v505
    %v507 = vand.u32 %v506, 4294901760
    %508 = vmatpush1.xpose.msra.mxu0 %v507
    %509 = vmatprep.subr.mxu0 0.0
    %v510 = vand.u32 %v236, 4294901760
    %v511 = vsub.f32 %v236, %v510
    %v512 = vand.u32 %v511, 4294901760
    %v513 = vsub.f32 %v511, %v512
    %v514 = vand.u32 %v513, 4294901760
    %515 = vmatpush1.xpose.msra.mxu0 %v514
    %516 = vmatprep.subr.mxu0 0.0
    %v517 = vand.u32 %v233, 4294901760
    %v518 = vsub.f32 %v233, %v517
    %v519 = vand.u32 %v518, 4294901760
    %v520 = vsub.f32 %v518, %v519
    %v521 = vand.u32 %v520, 4294901760
    %522 = vmatpush1.xpose.msra.mxu0 %v521
    %523 = vmatprep.subr.mxu0 0.0
    %v524 = vand.u32 %v230, 4294901760
    %v525 = vsub.f32 %v230, %v524
    %v526 = vand.u32 %v525, 4294901760
    %v527 = vsub.f32 %v525, %v526
    %v528 = vand.u32 %v527, 4294901760
    %529 = vmatpush1.xpose.msra.mxu0 %v528
    %530 = vmatprep.subr.mxu0 0.0
    %v531 = vand.u32 %v227, 4294901760
    %v532 = vsub.f32 %v227, %v531
    %v533 = vand.u32 %v532, 4294901760
    %v534 = vsub.f32 %v532, %v533
    %v535 = vand.u32 %v534, 4294901760
    %536 = vmatpush1.xpose.msra.mxu0 %v535
    %537 = vmatprep.subr.mxu0 0.0
    %v538 = vand.u32 %v224, 4294901760
    %v539 = vsub.f32 %v224, %v538
    %v540 = vand.u32 %v539, 4294901760
    %v541 = vsub.f32 %v539, %v540
    %v542 = vand.u32 %v541, 4294901760
    %543 = vmatpush1.xpose.msra.mxu0 %v542
    %544 = vmatprep.subr.mxu0 0.0
    %v545 = vand.u32 %v221, 4294901760
    %v546 = vsub.f32 %v221, %v545
    %v547 = vand.u32 %v546, 4294901760
    %v548 = vsub.f32 %v546, %v547
    %v549 = vand.u32 %v548, 4294901760
    %550 = vmatpush1.xpose.msra.mxu0 %v549
    %551 = vmatprep.subr.mxu0 0.0
    %v552 = vand.u32 %v218, 4294901760
    %v553 = vsub.f32 %v218, %v552
    %v554 = vand.u32 %v553, 4294901760
    %v555 = vsub.f32 %v553, %v554
    %v556 = vand.u32 %v555, 4294901760
    %557 = vmatpush1.xpose.msra.mxu0 %v556
    %558 = vmatprep.subr.mxu0 0.0
    %v559 = vand.u32 %v215, 4294901760
    %v560 = vsub.f32 %v215, %v559
    %v561 = vand.u32 %v560, 4294901760
    %v562 = vsub.f32 %v560, %v561
    %v563 = vand.u32 %v562, 4294901760
    %564 = vmatpush1.xpose.msra.mxu0 %v563
    %565 = vmatprep.subr.mxu0 0.0
    %v566 = vand.u32 %v212, 4294901760
    %v567 = vsub.f32 %v212, %v566
    %v568 = vand.u32 %v567, 4294901760
    %v569 = vsub.f32 %v567, %v568
    %v570 = vand.u32 %v569, 4294901760
    %571 = vmatpush1.xpose.msra.mxu0 %v570
    %572 = vmatprep.subr.mxu0 0.0
    %v573 = vand.u32 %v209, 4294901760
    %v574 = vsub.f32 %v209, %v573
    %v575 = vand.u32 %v574, 4294901760
    %v576 = vsub.f32 %v574, %v575
    %v577 = vand.u32 %v576, 4294901760
    %578 = vmatpush1.xpose.msra.mxu0 %v577
    %579 = vmatprep.subr.mxu0 0.0
    %v580 = vand.u32 %v206, 4294901760
    %v581 = vsub.f32 %v206, %v580
    %v582 = vand.u32 %v581, 4294901760
    %v583 = vsub.f32 %v581, %v582
    %v584 = vand.u32 %v583, 4294901760
    %585 = vmatpush1.xpose.msra.mxu0 %v584
    %586 = vmatprep.subr.mxu0 0.0
    %v587 = vand.u32 %v203, 4294901760
    %v588 = vsub.f32 %v203, %v587
    %v589 = vand.u32 %v588, 4294901760
    %v590 = vsub.f32 %v588, %v589
    %v591 = vand.u32 %v590, 4294901760
    %592 = vmatpush1.xpose.msra.mxu0 %v591
    %593 = vmatprep.subr.mxu0 0.0
    %v594 = vand.u32 %v200, 4294901760
    %v595 = vsub.f32 %v200, %v594
    %v596 = vand.u32 %v595, 4294901760
    %v597 = vsub.f32 %v595, %v596
    %v598 = vand.u32 %v597, 4294901760
    %599 = vmatpush1.xpose.msra.mxu0 %v598
    %600 = vmatprep.subr.mxu0 0.0
    %601 = vmatpush2.xpose.msra.mxu0 0.0
    %602 = vmatprep.subr.mxu0 0.0
    %603 = vmatpush2.xpose.msra.mxu0 0.0
    %604 = vmatprep.subr.mxu0 0.0
    %605 = vmatpush2.xpose.msra.mxu0 0.0
    %606 = vmatprep.subr.mxu0 0.0
    %607 = vmatpush2.xpose.msra.mxu0 0.0
    %608 = vmatprep.subr.mxu0 0.0
    %609 = vmatpush2.xpose.msra.mxu0 0.0
    %610 = vmatprep.subr.mxu0 0.0
    %611 = vmatpush2.xpose.msra.mxu0 0.0
    %612 = vmatprep.subr.mxu0 0.0
    %613 = vmatpush2.xpose.msra.mxu0 0.0
    %614 = vmatprep.subr.mxu0 0.0
    %615 = vmatpush2.xpose.msra.mxu0 0.0
    %616 = vmatprep.subr.mxu0 0.0
    %617 = vmatpush2.xpose.msra.mxu0 0.0
    %618 = vmatprep.subr.mxu0 0.0
    %619 = vmatpush2.xpose.msra.mxu0 0.0
    %620 = vmatprep.subr.mxu0 0.0
    %621 = vmatpush2.xpose.msra.mxu0 0.0
    %622 = vmatprep.subr.mxu0 0.0
    %623 = vmatpush2.xpose.msra.mxu0 0.0
    %624 = vmatprep.subr.mxu0 0.0
    %625 = vmatpush2.xpose.msra.mxu0 0.0
    %626 = vmatprep.subr.mxu0 0.0
    %627 = vmatpush2.xpose.msra.mxu0 0.0
    %628 = vmatprep.subr.mxu0 0.0
    %629 = vmatpush2.xpose.msra.mxu0 0.0
    %630 = vmatprep.subr.mxu0 0.0
    %631 = vmatpush2.xpose.msra.mxu0 0.0
    %632 = vmatprep.mubr.f32.mxu0 0.0
    %v633 = vand.u32 %v152, 4294901760
    %634 = vmatmul.mubr.f32.gmra.mxu0 %v633
    %v635 = vpop.f32.mrf.mxu0
    %v636 = vadd.f32 %v335, %v635
    %v637 = vpop.f32.mrf.mxu0
    %638 = vmatprep.mubr.f32.mxu0 0.0
    %v639 = vand.u32 %v155, 4294901760
    %640 = vmatmul.mubr.f32.gmra.mxu0 %v639
    %v641 = vpop.f32.mrf.mxu0
    %v642 = vadd.f32 %v345, %v641
    %v643 = vpop.f32.mrf.mxu0
    %644 = vmatprep.mubr.f32.mxu0 0.0
    %v645 = vand.u32 %v158, 4294901760
    %646 = vmatmul.mubr.f32.gmra.mxu0 %v645
    %v647 = vpop.f32.mrf.mxu0
    %v648 = vadd.f32 %v355, %v647
    %v649 = vpop.f32.mrf.mxu0
    %650 = vmatprep.mubr.f32.mxu0 0.0
    %v651 = vand.u32 %v161, 4294901760
    %652 = vmatmul.mubr.f32.gmra.mxu0 %v651
    %v653 = vpop.f32.mrf.mxu0
    %v654 = vadd.f32 %v365, %v653
    %v655 = vpop.f32.mrf.mxu0
    %656 = vmatprep.mubr.f32.mxu0 0.0
    %v657 = vand.u32 %v164, 4294901760
    %658 = vmatmul.mubr.f32.gmra.mxu0 %v657
    %v659 = vpop.f32.mrf.mxu0
    %v660 = vadd.f32 %v375, %v659
    %v661 = vpop.f32.mrf.mxu0
    %662 = vmatprep.mubr.f32.mxu0 0.0
    %v663 = vand.u32 %v167, 4294901760
    %664 = vmatmul.mubr.f32.gmra.mxu0 %v663
    %v665 = vpop.f32.mrf.mxu0
    %v666 = vadd.f32 %v385, %v665
    %v667 = vpop.f32.mrf.mxu0
    %668 = vmatprep.mubr.f32.mxu0 0.0
    %v669 = vand.u32 %v170, 4294901760
    %670 = vmatmul.mubr.f32.gmra.mxu0 %v669
    %v671 = vpop.f32.mrf.mxu0
    %v672 = vadd.f32 %v395, %v671
    %v673 = vpop.f32.mrf.mxu0
    %674 = vmatprep.mubr.f32.mxu0 0.0
    %v675 = vand.u32 %v173, 4294901760
    %676 = vmatmul.mubr.f32.gmra.mxu0 %v675
    %v677 = vpop.f32.mrf.mxu0
    %v678 = vadd.f32 %v405, %v677
    %v679 = vpop.f32.mrf.mxu0
    %680 = vmatprep.mubr.f32.mxu0 0.0
    %v681 = vand.u32 %v176, 4294901760
    %682 = vmatmul.mubr.f32.gmra.mxu0 %v681
    %v683 = vpop.f32.mrf.mxu0
    %v684 = vadd.f32 %v415, %v683
    %v685 = vpop.f32.mrf.mxu0
    %686 = vmatprep.mubr.f32.mxu0 0.0
    %v687 = vand.u32 %v179, 4294901760
    %688 = vmatmul.mubr.f32.gmra.mxu0 %v687
    %v689 = vpop.f32.mrf.mxu0
    %v690 = vadd.f32 %v425, %v689
    %v691 = vpop.f32.mrf.mxu0
    %692 = vmatprep.mubr.f32.mxu0 0.0
    %v693 = vand.u32 %v182, 4294901760
    %694 = vmatmul.mubr.f32.gmra.mxu0 %v693
    %v695 = vpop.f32.mrf.mxu0
    %v696 = vadd.f32 %v435, %v695
    %v697 = vpop.f32.mrf.mxu0
    %698 = vmatprep.mubr.f32.mxu0 0.0
    %v699 = vand.u32 %v185, 4294901760
    %700 = vmatmul.mubr.f32.gmra.mxu0 %v699
    %v701 = vpop.f32.mrf.mxu0
    %v702 = vadd.f32 %v445, %v701
    %v703 = vpop.f32.mrf.mxu0
    %704 = vmatprep.mubr.f32.mxu0 0.0
    %v705 = vand.u32 %v188, 4294901760
    %706 = vmatmul.mubr.f32.gmra.mxu0 %v705
    %v707 = vpop.f32.mrf.mxu0
    %v708 = vadd.f32 %v455, %v707
    %v709 = vpop.f32.mrf.mxu0
    %710 = vmatprep.mubr.f32.mxu0 0.0
    %v711 = vand.u32 %v191, 4294901760
    %712 = vmatmul.mubr.f32.gmra.mxu0 %v711
    %v713 = vpop.f32.mrf.mxu0
    %v714 = vadd.f32 %v465, %v713
    %v715 = vpop.f32.mrf.mxu0
    %716 = vmatprep.mubr.f32.mxu0 0.0
    %v717 = vand.u32 %v194, 4294901760
    %718 = vmatmul.mubr.f32.gmra.mxu0 %v717
    %v719 = vpop.f32.mrf.mxu0
    %v720 = vadd.f32 %v475, %v719
    %v721 = vpop.f32.mrf.mxu0
    %722 = vmatprep.mubr.f32.mxu0 0.0
    %v723 = vand.u32 %v197, 4294901760
    %724 = vmatmul.mubr.f32.gmra.mxu0 %v723
    %v725 = vpop.f32.mrf.mxu0
    %v726 = vadd.f32 %v485, %v725
    %v727 = vpop.f32.mrf.mxu0
    %728 = vdwg.mxu0
    %729 = vmatprep.subr.mxu0 0.0
    %v730 = vand.u32 %v245, 4294901760
    %v731 = vsub.f32 %v245, %v730
    %732 = vmatpush1.xpose.msra.mxu0 %v731
    %733 = vmatprep.subr.mxu0 0.0
    %v734 = vand.u32 %v242, 4294901760
    %v735 = vsub.f32 %v242, %v734
    %736 = vmatpush1.xpose.msra.mxu0 %v735
    %737 = vmatprep.subr.mxu0 0.0
    %v738 = vand.u32 %v239, 4294901760
    %v739 = vsub.f32 %v239, %v738
    %740 = vmatpush1.xpose.msra.mxu0 %v739
    %741 = vmatprep.subr.mxu0 0.0
    %v742 = vand.u32 %v236, 4294901760
    %v743 = vsub.f32 %v236, %v742
    %744 = vmatpush1.xpose.msra.mxu0 %v743
    %745 = vmatprep.subr.mxu0 0.0
    %v746 = vand.u32 %v233, 4294901760
    %v747 = vsub.f32 %v233, %v746
    %748 = vmatpush1.xpose.msra.mxu0 %v747
    %749 = vmatprep.subr.mxu0 0.0
    %v750 = vand.u32 %v230, 4294901760
    %v751 = vsub.f32 %v230, %v750
    %752 = vmatpush1.xpose.msra.mxu0 %v751
    %753 = vmatprep.subr.mxu0 0.0
    %v754 = vand.u32 %v227, 4294901760
    %v755 = vsub.f32 %v227, %v754
    %756 = vmatpush1.xpose.msra.mxu0 %v755
    %757 = vmatprep.subr.mxu0 0.0
    %v758 = vand.u32 %v224, 4294901760
    %v759 = vsub.f32 %v224, %v758
    %760 = vmatpush1.xpose.msra.mxu0 %v759
    %761 = vmatprep.subr.mxu0 0.0
    %v762 = vand.u32 %v221, 4294901760
    %v763 = vsub.f32 %v221, %v762
    %764 = vmatpush1.xpose.msra.mxu0 %v763
    %765 = vmatprep.subr.mxu0 0.0
    %v766 = vand.u32 %v218, 4294901760
    %v767 = vsub.f32 %v218, %v766
    %768 = vmatpush1.xpose.msra.mxu0 %v767
    %769 = vmatprep.subr.mxu0 0.0
    %v770 = vand.u32 %v215, 4294901760
    %v771 = vsub.f32 %v215, %v770
    %772 = vmatpush1.xpose.msra.mxu0 %v771
    %773 = vmatprep.subr.mxu0 0.0
    %v774 = vand.u32 %v212, 4294901760
    %v775 = vsub.f32 %v212, %v774
    %776 = vmatpush1.xpose.msra.mxu0 %v775
    %777 = vmatprep.subr.mxu0 0.0
    %v778 = vand.u32 %v209, 4294901760
    %v779 = vsub.f32 %v209, %v778
    %780 = vmatpush1.xpose.msra.mxu0 %v779
    %781 = vmatprep.subr.mxu0 0.0
    %v782 = vand.u32 %v206, 4294901760
    %v783 = vsub.f32 %v206, %v782
    %784 = vmatpush1.xpose.msra.mxu0 %v783
    %785 = vmatprep.subr.mxu0 0.0
    %v786 = vand.u32 %v203, 4294901760
    %v787 = vsub.f32 %v203, %v786
    %788 = vmatpush1.xpose.msra.mxu0 %v787
    %789 = vmatprep.subr.mxu0 0.0
    %v790 = vand.u32 %v200, 4294901760
    %v791 = vsub.f32 %v200, %v790
    %792 = vmatpush1.xpose.msra.mxu0 %v791
    %793 = vmatprep.subr.mxu0 0.0
    %794 = vmatpush2.xpose.msra.mxu0 0.0
    %795 = vmatprep.subr.mxu0 0.0
    %796 = vmatpush2.xpose.msra.mxu0 0.0
    %797 = vmatprep.subr.mxu0 0.0
    %798 = vmatpush2.xpose.msra.mxu0 0.0
    %799 = vmatprep.subr.mxu0 0.0
    %800 = vmatpush2.xpose.msra.mxu0 0.0
    %801 = vmatprep.subr.mxu0 0.0
    %802 = vmatpush2.xpose.msra.mxu0 0.0
    %803 = vmatprep.subr.mxu0 0.0
    %804 = vmatpush2.xpose.msra.mxu0 0.0
    %805 = vmatprep.subr.mxu0 0.0
    %806 = vmatpush2.xpose.msra.mxu0 0.0
    %807 = vmatprep.subr.mxu0 0.0
    %808 = vmatpush2.xpose.msra.mxu0 0.0
    %809 = vmatprep.subr.mxu0 0.0
    %810 = vmatpush2.xpose.msra.mxu0 0.0
    %811 = vmatprep.subr.mxu0 0.0
    %812 = vmatpush2.xpose.msra.mxu0 0.0
    %813 = vmatprep.subr.mxu0 0.0
    %814 = vmatpush2.xpose.msra.mxu0 0.0
    %815 = vmatprep.subr.mxu0 0.0
    %816 = vmatpush2.xpose.msra.mxu0 0.0
    %817 = vmatprep.subr.mxu0 0.0
    %818 = vmatpush2.xpose.msra.mxu0 0.0
    %819 = vmatprep.subr.mxu0 0.0
    %820 = vmatpush2.xpose.msra.mxu0 0.0
    %821 = vmatprep.subr.mxu0 0.0
    %822 = vmatpush2.xpose.msra.mxu0 0.0
    %823 = vmatprep.subr.mxu0 0.0
    %824 = vmatpush2.xpose.msra.mxu0 0.0
    %825 = vmatprep.mubr.f32.mxu0 0.0
    %v826 = vand.u32 %v152, 4294901760
    %v827 = vsub.f32 %v152, %v826
    %828 = vmatmul.mubr.f32.gmra.mxu0 %v827
    %v829 = vpop.f32.mrf.mxu0
    %v830 = vadd.f32 %v636, %v829
    %v831 = vpop.f32.mrf.mxu0
    %832 = vmatprep.mubr.f32.mxu0 0.0
    %v833 = vand.u32 %v155, 4294901760
    %v834 = vsub.f32 %v155, %v833
    %835 = vmatmul.mubr.f32.gmra.mxu0 %v834
    %v836 = vpop.f32.mrf.mxu0
    %v837 = vadd.f32 %v642, %v836
    %v838 = vpop.f32.mrf.mxu0
    %839 = vmatprep.mubr.f32.mxu0 0.0
    %v840 = vand.u32 %v158, 4294901760
    %v841 = vsub.f32 %v158, %v840
    %842 = vmatmul.mubr.f32.gmra.mxu0 %v841
    %v843 = vpop.f32.mrf.mxu0
    %v844 = vadd.f32 %v648, %v843
    %v845 = vpop.f32.mrf.mxu0
    %846 = vmatprep.mubr.f32.mxu0 0.0
    %v847 = vand.u32 %v161, 4294901760
    %v848 = vsub.f32 %v161, %v847
    %849 = vmatmul.mubr.f32.gmra.mxu0 %v848
    %v850 = vpop.f32.mrf.mxu0
    %v851 = vadd.f32 %v654, %v850
    %v852 = vpop.f32.mrf.mxu0
    %853 = vmatprep.mubr.f32.mxu0 0.0
    %v854 = vand.u32 %v164, 4294901760
    %v855 = vsub.f32 %v164, %v854
    %856 = vmatmul.mubr.f32.gmra.mxu0 %v855
    %v857 = vpop.f32.mrf.mxu0
    %v858 = vadd.f32 %v660, %v857
    %v859 = vpop.f32.mrf.mxu0
    %860 = vmatprep.mubr.f32.mxu0 0.0
    %v861 = vand.u32 %v167, 4294901760
    %v862 = vsub.f32 %v167, %v861
    %863 = vmatmul.mubr.f32.gmra.mxu0 %v862
    %v864 = vpop.f32.mrf.mxu0
    %v865 = vadd.f32 %v666, %v864
    %v866 = vpop.f32.mrf.mxu0
    %867 = vmatprep.mubr.f32.mxu0 0.0
    %v868 = vand.u32 %v170, 4294901760
    %v869 = vsub.f32 %v170, %v868
    %870 = vmatmul.mubr.f32.gmra.mxu0 %v869
    %v871 = vpop.f32.mrf.mxu0
    %v872 = vadd.f32 %v672, %v871
    %v873 = vpop.f32.mrf.mxu0
    %874 = vmatprep.mubr.f32.mxu0 0.0
    %v875 = vand.u32 %v173, 4294901760
    %v876 = vsub.f32 %v173, %v875
    %877 = vmatmul.mubr.f32.gmra.mxu0 %v876
    %v878 = vpop.f32.mrf.mxu0
    %v879 = vadd.f32 %v678, %v878
    %v880 = vpop.f32.mrf.mxu0
    %881 = vmatprep.mubr.f32.mxu0 0.0
    %v882 = vand.u32 %v176, 4294901760
    %v883 = vsub.f32 %v176, %v882
    %884 = vmatmul.mubr.f32.gmra.mxu0 %v883
    %v885 = vpop.f32.mrf.mxu0
    %v886 = vadd.f32 %v684, %v885
    %v887 = vpop.f32.mrf.mxu0
    %888 = vmatprep.mubr.f32.mxu0 0.0
    %v889 = vand.u32 %v179, 4294901760
    %v890 = vsub.f32 %v179, %v889
    %891 = vmatmul.mubr.f32.gmra.mxu0 %v890
    %v892 = vpop.f32.mrf.mxu0
    %v893 = vadd.f32 %v690, %v892
    %v894 = vpop.f32.mrf.mxu0
    %895 = vmatprep.mubr.f32.mxu0 0.0
    %v896 = vand.u32 %v182, 4294901760
    %v897 = vsub.f32 %v182, %v896
    %898 = vmatmul.mubr.f32.gmra.mxu0 %v897
    %v899 = vpop.f32.mrf.mxu0
    %v900 = vadd.f32 %v696, %v899
    %v901 = vpop.f32.mrf.mxu0
    %902 = vmatprep.mubr.f32.mxu0 0.0
    %v903 = vand.u32 %v185, 4294901760
    %v904 = vsub.f32 %v185, %v903
    %905 = vmatmul.mubr.f32.gmra.mxu0 %v904
    %v906 = vpop.f32.mrf.mxu0
    %v907 = vadd.f32 %v702, %v906
    %v908 = vpop.f32.mrf.mxu0
    %909 = vmatprep.mubr.f32.mxu0 0.0
    %v910 = vand.u32 %v188, 4294901760
    %v911 = vsub.f32 %v188, %v910
    %912 = vmatmul.mubr.f32.gmra.mxu0 %v911
    %v913 = vpop.f32.mrf.mxu0
    %v914 = vadd.f32 %v708, %v913
    %v915 = vpop.f32.mrf.mxu0
    %916 = vmatprep.mubr.f32.mxu0 0.0
    %v917 = vand.u32 %v191, 4294901760
    %v918 = vsub.f32 %v191, %v917
    %919 = vmatmul.mubr.f32.gmra.mxu0 %v918
    %v920 = vpop.f32.mrf.mxu0
    %v921 = vadd.f32 %v714, %v920
    %v922 = vpop.f32.mrf.mxu0
    %923 = vmatprep.mubr.f32.mxu0 0.0
    %v924 = vand.u32 %v194, 4294901760
    %v925 = vsub.f32 %v194, %v924
    %926 = vmatmul.mubr.f32.gmra.mxu0 %v925
    %v927 = vpop.f32.mrf.mxu0
    %v928 = vadd.f32 %v720, %v927
    %v929 = vpop.f32.mrf.mxu0
    %930 = vmatprep.mubr.f32.mxu0 0.0
    %v931 = vand.u32 %v197, 4294901760
    %v932 = vsub.f32 %v197, %v931
    %933 = vmatmul.mubr.f32.gmra.mxu0 %v932
    %v934 = vpop.f32.mrf.mxu0
    %v935 = vadd.f32 %v726, %v934
    %v936 = vpop.f32.mrf.mxu0
    %937 = vdwg.mxu0
    %938 = vmatprep.subr.mxu0 0.0
    %v939 = vand.u32 %v245, 4294901760
    %940 = vmatpush1.xpose.msra.mxu0 %v939
    %941 = vmatprep.subr.mxu0 0.0
    %v942 = vand.u32 %v242, 4294901760
    %943 = vmatpush1.xpose.msra.mxu0 %v942
    %944 = vmatprep.subr.mxu0 0.0
    %v945 = vand.u32 %v239, 4294901760
    %946 = vmatpush1.xpose.msra.mxu0 %v945
    %947 = vmatprep.subr.mxu0 0.0
    %v948 = vand.u32 %v236, 4294901760
    %949 = vmatpush1.xpose.msra.mxu0 %v948
    %950 = vmatprep.subr.mxu0 0.0
    %v951 = vand.u32 %v233, 4294901760
    %952 = vmatpush1.xpose.msra.mxu0 %v951
    %953 = vmatprep.subr.mxu0 0.0
    %v954 = vand.u32 %v230, 4294901760
    %955 = vmatpush1.xpose.msra.mxu0 %v954
    %956 = vmatprep.subr.mxu0 0.0
    %v957 = vand.u32 %v227, 4294901760
    %958 = vmatpush1.xpose.msra.mxu0 %v957
    %959 = vmatprep.subr.mxu0 0.0
    %v960 = vand.u32 %v224, 4294901760
    %961 = vmatpush1.xpose.msra.mxu0 %v960
    %962 = vmatprep.subr.mxu0 0.0
    %v963 = vand.u32 %v221, 4294901760
    %964 = vmatpush1.xpose.msra.mxu0 %v963
    %965 = vmatprep.subr.mxu0 0.0
    %v966 = vand.u32 %v218, 4294901760
    %967 = vmatpush1.xpose.msra.mxu0 %v966
    %968 = vmatprep.subr.mxu0 0.0
    %v969 = vand.u32 %v215, 4294901760
    %970 = vmatpush1.xpose.msra.mxu0 %v969
    %971 = vmatprep.subr.mxu0 0.0
    %v972 = vand.u32 %v212, 4294901760
    %973 = vmatpush1.xpose.msra.mxu0 %v972
    %974 = vmatprep.subr.mxu0 0.0
    %v975 = vand.u32 %v209, 4294901760
    %976 = vmatpush1.xpose.msra.mxu0 %v975
    %977 = vmatprep.subr.mxu0 0.0
    %v978 = vand.u32 %v206, 4294901760
    %979 = vmatpush1.xpose.msra.mxu0 %v978
    %980 = vmatprep.subr.mxu0 0.0
    %v981 = vand.u32 %v203, 4294901760
    %982 = vmatpush1.xpose.msra.mxu0 %v981
    %983 = vmatprep.subr.mxu0 0.0
    %v984 = vand.u32 %v200, 4294901760
    %985 = vmatpush1.xpose.msra.mxu0 %v984
    %986 = vmatprep.subr.mxu0 0.0
    %987 = vmatpush2.xpose.msra.mxu0 0.0
    %988 = vmatprep.subr.mxu0 0.0
    %989 = vmatpush2.xpose.msra.mxu0 0.0
    %990 = vmatprep.subr.mxu0 0.0
    %991 = vmatpush2.xpose.msra.mxu0 0.0
    %992 = vmatprep.subr.mxu0 0.0
    %993 = vmatpush2.xpose.msra.mxu0 0.0
    %994 = vmatprep.subr.mxu0 0.0
    %995 = vmatpush2.xpose.msra.mxu0 0.0
    %996 = vmatprep.subr.mxu0 0.0
    %997 = vmatpush2.xpose.msra.mxu0 0.0
    %998 = vmatprep.subr.mxu0 0.0
    %999 = vmatpush2.xpose.msra.mxu0 0.0
    %1000 = vmatprep.subr.mxu0 0.0
    %1001 = vmatpush2.xpose.msra.mxu0 0.0
    %1002 = vmatprep.subr.mxu0 0.0
    %1003 = vmatpush2.xpose.msra.mxu0 0.0
    %1004 = vmatprep.subr.mxu0 0.0
    %1005 = vmatpush2.xpose.msra.mxu0 0.0
    %1006 = vmatprep.subr.mxu0 0.0
    %1007 = vmatpush2.xpose.msra.mxu0 0.0
    %1008 = vmatprep.subr.mxu0 0.0
    %1009 = vmatpush2.xpose.msra.mxu0 0.0
    %1010 = vmatprep.subr.mxu0 0.0
    %1011 = vmatpush2.xpose.msra.mxu0 0.0
    %1012 = vmatprep.subr.mxu0 0.0
    %1013 = vmatpush2.xpose.msra.mxu0 0.0
    %1014 = vmatprep.subr.mxu0 0.0
    %1015 = vmatpush2.xpose.msra.mxu0 0.0
    %1016 = vmatprep.subr.mxu0 0.0
    %1017 = vmatpush2.xpose.msra.mxu0 0.0
    %1018 = vmatprep.mubr.f32.mxu0 0.0
    %v1019 = vand.u32 %v152, 4294901760
    %v1020 = vsub.f32 %v152, %v1019
    %v1021 = vand.u32 %v1020, 4294901760
    %1022 = vmatmul.mubr.f32.gmra.mxu0 %v1021
    %v1023 = vpop.f32.mrf.mxu0
    %v1024 = vadd.f32 %v830, %v1023
    %v1025 = vpop.f32.mrf.mxu0
    %1026 = vmatprep.mubr.f32.mxu0 0.0
    %v1027 = vand.u32 %v155, 4294901760
    %v1028 = vsub.f32 %v155, %v1027
    %v1029 = vand.u32 %v1028, 4294901760
    %1030 = vmatmul.mubr.f32.gmra.mxu0 %v1029
    %v1031 = vpop.f32.mrf.mxu0
    %v1032 = vadd.f32 %v837, %v1031
    %v1033 = vpop.f32.mrf.mxu0
    %1034 = vmatprep.mubr.f32.mxu0 0.0
    %v1035 = vand.u32 %v158, 4294901760
    %v1036 = vsub.f32 %v158, %v1035
    %v1037 = vand.u32 %v1036, 4294901760
    %1038 = vmatmul.mubr.f32.gmra.mxu0 %v1037
    %v1039 = vpop.f32.mrf.mxu0
    %v1040 = vadd.f32 %v844, %v1039
    %v1041 = vpop.f32.mrf.mxu0
    %1042 = vmatprep.mubr.f32.mxu0 0.0
    %v1043 = vand.u32 %v161, 4294901760
    %v1044 = vsub.f32 %v161, %v1043
    %v1045 = vand.u32 %v1044, 4294901760
    %1046 = vmatmul.mubr.f32.gmra.mxu0 %v1045
    %v1047 = vpop.f32.mrf.mxu0
    %v1048 = vadd.f32 %v851, %v1047
    %v1049 = vpop.f32.mrf.mxu0
    %1050 = vmatprep.mubr.f32.mxu0 0.0
    %v1051 = vand.u32 %v164, 4294901760
    %v1052 = vsub.f32 %v164, %v1051
    %v1053 = vand.u32 %v1052, 4294901760
    %1054 = vmatmul.mubr.f32.gmra.mxu0 %v1053
    %v1055 = vpop.f32.mrf.mxu0
    %v1056 = vadd.f32 %v858, %v1055
    %v1057 = vpop.f32.mrf.mxu0
    %1058 = vmatprep.mubr.f32.mxu0 0.0
    %v1059 = vand.u32 %v167, 4294901760
    %v1060 = vsub.f32 %v167, %v1059
    %v1061 = vand.u32 %v1060, 4294901760
    %1062 = vmatmul.mubr.f32.gmra.mxu0 %v1061
    %v1063 = vpop.f32.mrf.mxu0
    %v1064 = vadd.f32 %v865, %v1063
    %v1065 = vpop.f32.mrf.mxu0
    %1066 = vmatprep.mubr.f32.mxu0 0.0
    %v1067 = vand.u32 %v170, 4294901760
    %v1068 = vsub.f32 %v170, %v1067
    %v1069 = vand.u32 %v1068, 4294901760
    %1070 = vmatmul.mubr.f32.gmra.mxu0 %v1069
    %v1071 = vpop.f32.mrf.mxu0
    %v1072 = vadd.f32 %v872, %v1071
    %v1073 = vpop.f32.mrf.mxu0
    %1074 = vmatprep.mubr.f32.mxu0 0.0
    %v1075 = vand.u32 %v173, 4294901760
    %v1076 = vsub.f32 %v173, %v1075
    %v1077 = vand.u32 %v1076, 4294901760
    %1078 = vmatmul.mubr.f32.gmra.mxu0 %v1077
    %v1079 = vpop.f32.mrf.mxu0
    %v1080 = vadd.f32 %v879, %v1079
    %v1081 = vpop.f32.mrf.mxu0
    %1082 = vmatprep.mubr.f32.mxu0 0.0
    %v1083 = vand.u32 %v176, 4294901760
    %v1084 = vsub.f32 %v176, %v1083
    %v1085 = vand.u32 %v1084, 4294901760
    %1086 = vmatmul.mubr.f32.gmra.mxu0 %v1085
    %v1087 = vpop.f32.mrf.mxu0
    %v1088 = vadd.f32 %v886, %v1087
    %v1089 = vpop.f32.mrf.mxu0
    %1090 = vmatprep.mubr.f32.mxu0 0.0
    %v1091 = vand.u32 %v179, 4294901760
    %v1092 = vsub.f32 %v179, %v1091
    %v1093 = vand.u32 %v1092, 4294901760
    %1094 = vmatmul.mubr.f32.gmra.mxu0 %v1093
    %v1095 = vpop.f32.mrf.mxu0
    %v1096 = vadd.f32 %v893, %v1095
    %v1097 = vpop.f32.mrf.mxu0
    %1098 = vmatprep.mubr.f32.mxu0 0.0
    %v1099 = vand.u32 %v182, 4294901760
    %v1100 = vsub.f32 %v182, %v1099
    %v1101 = vand.u32 %v1100, 4294901760
    %1102 = vmatmul.mubr.f32.gmra.mxu0 %v1101
    %v1103 = vpop.f32.mrf.mxu0
    %v1104 = vadd.f32 %v900, %v1103
    %v1105 = vpop.f32.mrf.mxu0
    %1106 = vmatprep.mubr.f32.mxu0 0.0
    %v1107 = vand.u32 %v185, 4294901760
    %v1108 = vsub.f32 %v185, %v1107
    %v1109 = vand.u32 %v1108, 4294901760
    %1110 = vmatmul.mubr.f32.gmra.mxu0 %v1109
    %v1111 = vpop.f32.mrf.mxu0
    %v1112 = vadd.f32 %v907, %v1111
    %v1113 = vpop.f32.mrf.mxu0
    %1114 = vmatprep.mubr.f32.mxu0 0.0
    %v1115 = vand.u32 %v188, 4294901760
    %v1116 = vsub.f32 %v188, %v1115
    %v1117 = vand.u32 %v1116, 4294901760
    %1118 = vmatmul.mubr.f32.gmra.mxu0 %v1117
    %v1119 = vpop.f32.mrf.mxu0
    %v1120 = vadd.f32 %v914, %v1119
    %v1121 = vpop.f32.mrf.mxu0
    %1122 = vmatprep.mubr.f32.mxu0 0.0
    %v1123 = vand.u32 %v191, 4294901760
    %v1124 = vsub.f32 %v191, %v1123
    %v1125 = vand.u32 %v1124, 4294901760
    %1126 = vmatmul.mubr.f32.gmra.mxu0 %v1125
    %v1127 = vpop.f32.mrf.mxu0
    %v1128 = vadd.f32 %v921, %v1127
    %v1129 = vpop.f32.mrf.mxu0
    %1130 = vmatprep.mubr.f32.mxu0 0.0
    %v1131 = vand.u32 %v194, 4294901760
    %v1132 = vsub.f32 %v194, %v1131
    %v1133 = vand.u32 %v1132, 4294901760
    %1134 = vmatmul.mubr.f32.gmra.mxu0 %v1133
    %v1135 = vpop.f32.mrf.mxu0
    %v1136 = vadd.f32 %v928, %v1135
    %v1137 = vpop.f32.mrf.mxu0
    %1138 = vmatprep.mubr.f32.mxu0 0.0
    %v1139 = vand.u32 %v197, 4294901760
    %v1140 = vsub.f32 %v197, %v1139
    %v1141 = vand.u32 %v1140, 4294901760
    %1142 = vmatmul.mubr.f32.gmra.mxu0 %v1141
    %v1143 = vpop.f32.mrf.mxu0
    %v1144 = vadd.f32 %v935, %v1143
    %v1145 = vpop.f32.mrf.mxu0
    %1146 = vdwg.mxu0
    %1147 = vmatprep.subr.mxu0 0.0
    %v1148 = vand.u32 %v245, 4294901760
    %v1149 = vsub.f32 %v245, %v1148
    %v1150 = vand.u32 %v1149, 4294901760
    %1151 = vmatpush1.xpose.msra.mxu0 %v1150
    %1152 = vmatprep.subr.mxu0 0.0
    %v1153 = vand.u32 %v242, 4294901760
    %v1154 = vsub.f32 %v242, %v1153
    %v1155 = vand.u32 %v1154, 4294901760
    %1156 = vmatpush1.xpose.msra.mxu0 %v1155
    %1157 = vmatprep.subr.mxu0 0.0
    %v1158 = vand.u32 %v239, 4294901760
    %v1159 = vsub.f32 %v239, %v1158
    %v1160 = vand.u32 %v1159, 4294901760
    %1161 = vmatpush1.xpose.msra.mxu0 %v1160
    %1162 = vmatprep.subr.mxu0 0.0
    %v1163 = vand.u32 %v236, 4294901760
    %v1164 = vsub.f32 %v236, %v1163
    %v1165 = vand.u32 %v1164, 4294901760
    %1166 = vmatpush1.xpose.msra.mxu0 %v1165
    %1167 = vmatprep.subr.mxu0 0.0
    %v1168 = vand.u32 %v233, 4294901760
    %v1169 = vsub.f32 %v233, %v1168
    %v1170 = vand.u32 %v1169, 4294901760
    %1171 = vmatpush1.xpose.msra.mxu0 %v1170
    %1172 = vmatprep.subr.mxu0 0.0
    %v1173 = vand.u32 %v230, 4294901760
    %v1174 = vsub.f32 %v230, %v1173
    %v1175 = vand.u32 %v1174, 4294901760
    %1176 = vmatpush1.xpose.msra.mxu0 %v1175
    %1177 = vmatprep.subr.mxu0 0.0
    %v1178 = vand.u32 %v227, 4294901760
    %v1179 = vsub.f32 %v227, %v1178
    %v1180 = vand.u32 %v1179, 4294901760
    %1181 = vmatpush1.xpose.msra.mxu0 %v1180
    %1182 = vmatprep.subr.mxu0 0.0
    %v1183 = vand.u32 %v224, 4294901760
    %v1184 = vsub.f32 %v224, %v1183
    %v1185 = vand.u32 %v1184, 4294901760
    %1186 = vmatpush1.xpose.msra.mxu0 %v1185
    %1187 = vmatprep.subr.mxu0 0.0
    %v1188 = vand.u32 %v221, 4294901760
    %v1189 = vsub.f32 %v221, %v1188
    %v1190 = vand.u32 %v1189, 4294901760
    %1191 = vmatpush1.xpose.msra.mxu0 %v1190
    %1192 = vmatprep.subr.mxu0 0.0
    %v1193 = vand.u32 %v218, 4294901760
    %v1194 = vsub.f32 %v218, %v1193
    %v1195 = vand.u32 %v1194, 4294901760
    %1196 = vmatpush1.xpose.msra.mxu0 %v1195
    %1197 = vmatprep.subr.mxu0 0.0
    %v1198 = vand.u32 %v215, 4294901760
    %v1199 = vsub.f32 %v215, %v1198
    %v1200 = vand.u32 %v1199, 4294901760
    %1201 = vmatpush1.xpose.msra.mxu0 %v1200
    %1202 = vmatprep.subr.mxu0 0.0
    %v1203 = vand.u32 %v212, 4294901760
    %v1204 = vsub.f32 %v212, %v1203
    %v1205 = vand.u32 %v1204, 4294901760
    %1206 = vmatpush1.xpose.msra.mxu0 %v1205
    %1207 = vmatprep.subr.mxu0 0.0
    %v1208 = vand.u32 %v209, 4294901760
    %v1209 = vsub.f32 %v209, %v1208
    %v1210 = vand.u32 %v1209, 4294901760
    %1211 = vmatpush1.xpose.msra.mxu0 %v1210
    %1212 = vmatprep.subr.mxu0 0.0
    %v1213 = vand.u32 %v206, 4294901760
    %v1214 = vsub.f32 %v206, %v1213
    %v1215 = vand.u32 %v1214, 4294901760
    %1216 = vmatpush1.xpose.msra.mxu0 %v1215
    %1217 = vmatprep.subr.mxu0 0.0
    %v1218 = vand.u32 %v203, 4294901760
    %v1219 = vsub.f32 %v203, %v1218
    %v1220 = vand.u32 %v1219, 4294901760
    %1221 = vmatpush1.xpose.msra.mxu0 %v1220
    %1222 = vmatprep.subr.mxu0 0.0
    %v1223 = vand.u32 %v200, 4294901760
    %v1224 = vsub.f32 %v200, %v1223
    %v1225 = vand.u32 %v1224, 4294901760
    %1226 = vmatpush1.xpose.msra.mxu0 %v1225
    %1227 = vmatprep.subr.mxu0 0.0
    %1228 = vmatpush2.xpose.msra.mxu0 0.0
    %1229 = vmatprep.subr.mxu0 0.0
    %1230 = vmatpush2.xpose.msra.mxu0 0.0
    %1231 = vmatprep.subr.mxu0 0.0
    %1232 = vmatpush2.xpose.msra.mxu0 0.0
    %1233 = vmatprep.subr.mxu0 0.0
    %1234 = vmatpush2.xpose.msra.mxu0 0.0
    %1235 = vmatprep.subr.mxu0 0.0
    %1236 = vmatpush2.xpose.msra.mxu0 0.0
    %1237 = vmatprep.subr.mxu0 0.0
    %1238 = vmatpush2.xpose.msra.mxu0 0.0
    %1239 = vmatprep.subr.mxu0 0.0
    %1240 = vmatpush2.xpose.msra.mxu0 0.0
    %1241 = vmatprep.subr.mxu0 0.0
    %1242 = vmatpush2.xpose.msra.mxu0 0.0
    %1243 = vmatprep.subr.mxu0 0.0
    %1244 = vmatpush2.xpose.msra.mxu0 0.0
    %1245 = vmatprep.subr.mxu0 0.0
    %1246 = vmatpush2.xpose.msra.mxu0 0.0
    %1247 = vmatprep.subr.mxu0 0.0
    %1248 = vmatpush2.xpose.msra.mxu0 0.0
    %1249 = vmatprep.subr.mxu0 0.0
    %1250 = vmatpush2.xpose.msra.mxu0 0.0
    %1251 = vmatprep.subr.mxu0 0.0
    %1252 = vmatpush2.xpose.msra.mxu0 0.0
    %1253 = vmatprep.subr.mxu0 0.0
    %1254 = vmatpush2.xpose.msra.mxu0 0.0
    %1255 = vmatprep.subr.mxu0 0.0
    %1256 = vmatpush2.xpose.msra.mxu0 0.0
    %1257 = vmatprep.subr.mxu0 0.0
    %1258 = vmatpush2.xpose.msra.mxu0 0.0
    %1259 = vmatprep.mubr.f32.mxu0 0.0
    %v1260 = vand.u32 %v152, 4294901760
    %1261 = vmatmul.mubr.f32.gmra.mxu0 %v1260
    %v1262 = vpop.f32.mrf.mxu0
    %v1263 = vadd.f32 %v1024, %v1262
    %v1264 = vpop.f32.mrf.mxu0
    %1265 = vmatprep.mubr.f32.mxu0 0.0
    %v1266 = vand.u32 %v155, 4294901760
    %1267 = vmatmul.mubr.f32.gmra.mxu0 %v1266
    %v1268 = vpop.f32.mrf.mxu0
    %v1269 = vadd.f32 %v1032, %v1268
    %v1270 = vpop.f32.mrf.mxu0
    %1271 = vmatprep.mubr.f32.mxu0 0.0
    %v1272 = vand.u32 %v158, 4294901760
    %1273 = vmatmul.mubr.f32.gmra.mxu0 %v1272
    %v1274 = vpop.f32.mrf.mxu0
    %v1275 = vadd.f32 %v1040, %v1274
    %v1276 = vpop.f32.mrf.mxu0
    %1277 = vmatprep.mubr.f32.mxu0 0.0
    %v1278 = vand.u32 %v161, 4294901760
    %1279 = vmatmul.mubr.f32.gmra.mxu0 %v1278
    %v1280 = vpop.f32.mrf.mxu0
    %v1281 = vadd.f32 %v1048, %v1280
    %v1282 = vpop.f32.mrf.mxu0
    %1283 = vmatprep.mubr.f32.mxu0 0.0
    %v1284 = vand.u32 %v164, 4294901760
    %1285 = vmatmul.mubr.f32.gmra.mxu0 %v1284
    %v1286 = vpop.f32.mrf.mxu0
    %v1287 = vadd.f32 %v1056, %v1286
    %v1288 = vpop.f32.mrf.mxu0
    %1289 = vmatprep.mubr.f32.mxu0 0.0
    %v1290 = vand.u32 %v167, 4294901760
    %1291 = vmatmul.mubr.f32.gmra.mxu0 %v1290
    %v1292 = vpop.f32.mrf.mxu0
    %v1293 = vadd.f32 %v1064, %v1292
    %v1294 = vpop.f32.mrf.mxu0
    %1295 = vmatprep.mubr.f32.mxu0 0.0
    %v1296 = vand.u32 %v170, 4294901760
    %1297 = vmatmul.mubr.f32.gmra.mxu0 %v1296
    %v1298 = vpop.f32.mrf.mxu0
    %v1299 = vadd.f32 %v1072, %v1298
    %v1300 = vpop.f32.mrf.mxu0
    %1301 = vmatprep.mubr.f32.mxu0 0.0
    %v1302 = vand.u32 %v173, 4294901760
    %1303 = vmatmul.mubr.f32.gmra.mxu0 %v1302
    %v1304 = vpop.f32.mrf.mxu0
    %v1305 = vadd.f32 %v1080, %v1304
    %v1306 = vpop.f32.mrf.mxu0
    %1307 = vmatprep.mubr.f32.mxu0 0.0
    %v1308 = vand.u32 %v176, 4294901760
    %1309 = vmatmul.mubr.f32.gmra.mxu0 %v1308
    %v1310 = vpop.f32.mrf.mxu0
    %v1311 = vadd.f32 %v1088, %v1310
    %v1312 = vpop.f32.mrf.mxu0
    %1313 = vmatprep.mubr.f32.mxu0 0.0
    %v1314 = vand.u32 %v179, 4294901760
    %1315 = vmatmul.mubr.f32.gmra.mxu0 %v1314
    %v1316 = vpop.f32.mrf.mxu0
    %v1317 = vadd.f32 %v1096, %v1316
    %v1318 = vpop.f32.mrf.mxu0
    %1319 = vmatprep.mubr.f32.mxu0 0.0
    %v1320 = vand.u32 %v182, 4294901760
    %1321 = vmatmul.mubr.f32.gmra.mxu0 %v1320
    %v1322 = vpop.f32.mrf.mxu0
    %v1323 = vadd.f32 %v1104, %v1322
    %v1324 = vpop.f32.mrf.mxu0
    %1325 = vmatprep.mubr.f32.mxu0 0.0
    %v1326 = vand.u32 %v185, 4294901760
    %1327 = vmatmul.mubr.f32.gmra.mxu0 %v1326
    %v1328 = vpop.f32.mrf.mxu0
    %v1329 = vadd.f32 %v1112, %v1328
    %v1330 = vpop.f32.mrf.mxu0
    %1331 = vmatprep.mubr.f32.mxu0 0.0
    %v1332 = vand.u32 %v188, 4294901760
    %1333 = vmatmul.mubr.f32.gmra.mxu0 %v1332
    %v1334 = vpop.f32.mrf.mxu0
    %v1335 = vadd.f32 %v1120, %v1334
    %v1336 = vpop.f32.mrf.mxu0
    %1337 = vmatprep.mubr.f32.mxu0 0.0
    %v1338 = vand.u32 %v191, 4294901760
    %1339 = vmatmul.mubr.f32.gmra.mxu0 %v1338
    %v1340 = vpop.f32.mrf.mxu0
    %v1341 = vadd.f32 %v1128, %v1340
    %v1342 = vpop.f32.mrf.mxu0
    %1343 = vmatprep.mubr.f32.mxu0 0.0
    %v1344 = vand.u32 %v194, 4294901760
    %1345 = vmatmul.mubr.f32.gmra.mxu0 %v1344
    %v1346 = vpop.f32.mrf.mxu0
    %v1347 = vadd.f32 %v1136, %v1346
    %v1348 = vpop.f32.mrf.mxu0
    %1349 = vmatprep.mubr.f32.mxu0 0.0
    %v1350 = vand.u32 %v197, 4294901760
    %1351 = vmatmul.mubr.f32.gmra.mxu0 %v1350
    %v1352 = vpop.f32.mrf.mxu0
    %v1353 = vadd.f32 %v1144, %v1352
    %v1354 = vpop.f32.mrf.mxu0
    %1355 = vdwg.mxu0
    %1356 = vmatprep.subr.mxu0 0.0
    %v1357 = vand.u32 %v245, 4294901760
    %1358 = vmatpush1.xpose.msra.mxu0 %v1357
    %1359 = vmatprep.subr.mxu0 0.0
    %v1360 = vand.u32 %v242, 4294901760
    %1361 = vmatpush1.xpose.msra.mxu0 %v1360
    %1362 = vmatprep.subr.mxu0 0.0
    %v1363 = vand.u32 %v239, 4294901760
    %1364 = vmatpush1.xpose.msra.mxu0 %v1363
    %1365 = vmatprep.subr.mxu0 0.0
    %v1366 = vand.u32 %v236, 4294901760
    %1367 = vmatpush1.xpose.msra.mxu0 %v1366
    %1368 = vmatprep.subr.mxu0 0.0
    %v1369 = vand.u32 %v233, 4294901760
    %1370 = vmatpush1.xpose.msra.mxu0 %v1369
    %1371 = vmatprep.subr.mxu0 0.0
    %v1372 = vand.u32 %v230, 4294901760
    %1373 = vmatpush1.xpose.msra.mxu0 %v1372
    %1374 = vmatprep.subr.mxu0 0.0
    %v1375 = vand.u32 %v227, 4294901760
    %1376 = vmatpush1.xpose.msra.mxu0 %v1375
    %1377 = vmatprep.subr.mxu0 0.0
    %v1378 = vand.u32 %v224, 4294901760
    %1379 = vmatpush1.xpose.msra.mxu0 %v1378
    %1380 = vmatprep.subr.mxu0 0.0
    %v1381 = vand.u32 %v221, 4294901760
    %1382 = vmatpush1.xpose.msra.mxu0 %v1381
    %1383 = vmatprep.subr.mxu0 0.0
    %v1384 = vand.u32 %v218, 4294901760
    %1385 = vmatpush1.xpose.msra.mxu0 %v1384
    %1386 = vmatprep.subr.mxu0 0.0
    %v1387 = vand.u32 %v215, 4294901760
    %1388 = vmatpush1.xpose.msra.mxu0 %v1387
    %1389 = vmatprep.subr.mxu0 0.0
    %v1390 = vand.u32 %v212, 4294901760
    %1391 = vmatpush1.xpose.msra.mxu0 %v1390
    %1392 = vmatprep.subr.mxu0 0.0
    %v1393 = vand.u32 %v209, 4294901760
    %1394 = vmatpush1.xpose.msra.mxu0 %v1393
    %1395 = vmatprep.subr.mxu0 0.0
    %v1396 = vand.u32 %v206, 4294901760
    %1397 = vmatpush1.xpose.msra.mxu0 %v1396
    %1398 = vmatprep.subr.mxu0 0.0
    %v1399 = vand.u32 %v203, 4294901760
    %1400 = vmatpush1.xpose.msra.mxu0 %v1399
    %1401 = vmatprep.subr.mxu0 0.0
    %v1402 = vand.u32 %v200, 4294901760
    %1403 = vmatpush1.xpose.msra.mxu0 %v1402
    %1404 = vmatprep.subr.mxu0 0.0
    %1405 = vmatpush2.xpose.msra.mxu0 0.0
    %1406 = vmatprep.subr.mxu0 0.0
    %1407 = vmatpush2.xpose.msra.mxu0 0.0
    %1408 = vmatprep.subr.mxu0 0.0
    %1409 = vmatpush2.xpose.msra.mxu0 0.0
    %1410 = vmatprep.subr.mxu0 0.0
    %1411 = vmatpush2.xpose.msra.mxu0 0.0
    %1412 = vmatprep.subr.mxu0 0.0
    %1413 = vmatpush2.xpose.msra.mxu0 0.0
    %1414 = vmatprep.subr.mxu0 0.0
    %1415 = vmatpush2.xpose.msra.mxu0 0.0
    %1416 = vmatprep.subr.mxu0 0.0
    %1417 = vmatpush2.xpose.msra.mxu0 0.0
    %1418 = vmatprep.subr.mxu0 0.0
    %1419 = vmatpush2.xpose.msra.mxu0 0.0
    %1420 = vmatprep.subr.mxu0 0.0
    %1421 = vmatpush2.xpose.msra.mxu0 0.0
    %1422 = vmatprep.subr.mxu0 0.0
    %1423 = vmatpush2.xpose.msra.mxu0 0.0
    %1424 = vmatprep.subr.mxu0 0.0
    %1425 = vmatpush2.xpose.msra.mxu0 0.0
    %1426 = vmatprep.subr.mxu0 0.0
    %1427 = vmatpush2.xpose.msra.mxu0 0.0
    %1428 = vmatprep.subr.mxu0 0.0
    %1429 = vmatpush2.xpose.msra.mxu0 0.0
    %1430 = vmatprep.subr.mxu0 0.0
    %1431 = vmatpush2.xpose.msra.mxu0 0.0
    %1432 = vmatprep.subr.mxu0 0.0
    %1433 = vmatpush2.xpose.msra.mxu0 0.0
    %1434 = vmatprep.subr.mxu0 0.0
    %1435 = vmatpush2.xpose.msra.mxu0 0.0
    %1436 = vmatprep.mubr.f32.mxu0 0.0
    %v1437 = vand.u32 %v152, 4294901760
    %1438 = vmatmul.mubr.f32.gmra.mxu0 %v1437
    %v1439 = vpop.f32.mrf.mxu0
    %v1440 = vadd.f32 %v1263, %v1439
    %v1441 = vpop.f32.mrf.mxu0
    %1442 = vmatprep.mubr.f32.mxu0 0.0
    %v1443 = vand.u32 %v155, 4294901760
    %1444 = vmatmul.mubr.f32.gmra.mxu0 %v1443
    %v1445 = vpop.f32.mrf.mxu0
    %v1446 = vadd.f32 %v1269, %v1445
    %v1447 = vpop.f32.mrf.mxu0
    %1448 = vmatprep.mubr.f32.mxu0 0.0
    %v1449 = vand.u32 %v158, 4294901760
    %1450 = vmatmul.mubr.f32.gmra.mxu0 %v1449
    %v1451 = vpop.f32.mrf.mxu0
    %v1452 = vadd.f32 %v1275, %v1451
    %v1453 = vpop.f32.mrf.mxu0
    %1454 = vmatprep.mubr.f32.mxu0 0.0
    %v1455 = vand.u32 %v161, 4294901760
    %1456 = vmatmul.mubr.f32.gmra.mxu0 %v1455
    %v1457 = vpop.f32.mrf.mxu0
    %v1458 = vadd.f32 %v1281, %v1457
    %v1459 = vpop.f32.mrf.mxu0
    %1460 = vmatprep.mubr.f32.mxu0 0.0
    %v1461 = vand.u32 %v164, 4294901760
    %1462 = vmatmul.mubr.f32.gmra.mxu0 %v1461
    %v1463 = vpop.f32.mrf.mxu0
    %v1464 = vadd.f32 %v1287, %v1463
    %v1465 = vpop.f32.mrf.mxu0
    %1466 = vmatprep.mubr.f32.mxu0 0.0
    %v1467 = vand.u32 %v167, 4294901760
    %1468 = vmatmul.mubr.f32.gmra.mxu0 %v1467
    %v1469 = vpop.f32.mrf.mxu0
    %v1470 = vadd.f32 %v1293, %v1469
    %v1471 = vpop.f32.mrf.mxu0
    %1472 = vmatprep.mubr.f32.mxu0 0.0
    %v1473 = vand.u32 %v170, 4294901760
    %1474 = vmatmul.mubr.f32.gmra.mxu0 %v1473
    %v1475 = vpop.f32.mrf.mxu0
    %v1476 = vadd.f32 %v1299, %v1475
    %v1477 = vpop.f32.mrf.mxu0
    %1478 = vmatprep.mubr.f32.mxu0 0.0
    %v1479 = vand.u32 %v173, 4294901760
    %1480 = vmatmul.mubr.f32.gmra.mxu0 %v1479
    %v1481 = vpop.f32.mrf.mxu0
    %v1482 = vadd.f32 %v1305, %v1481
    %v1483 = vpop.f32.mrf.mxu0
    %1484 = vmatprep.mubr.f32.mxu0 0.0
    %v1485 = vand.u32 %v176, 4294901760
    %1486 = vmatmul.mubr.f32.gmra.mxu0 %v1485
    %v1487 = vpop.f32.mrf.mxu0
    %v1488 = vadd.f32 %v1311, %v1487
    %v1489 = vpop.f32.mrf.mxu0
    %1490 = vmatprep.mubr.f32.mxu0 0.0
    %v1491 = vand.u32 %v179, 4294901760
    %1492 = vmatmul.mubr.f32.gmra.mxu0 %v1491
    %v1493 = vpop.f32.mrf.mxu0
    %v1494 = vadd.f32 %v1317, %v1493
    %v1495 = vpop.f32.mrf.mxu0
    %1496 = vmatprep.mubr.f32.mxu0 0.0
    %v1497 = vand.u32 %v182, 4294901760
    %1498 = vmatmul.mubr.f32.gmra.mxu0 %v1497
    %v1499 = vpop.f32.mrf.mxu0
    %v1500 = vadd.f32 %v1323, %v1499
    %v1501 = vpop.f32.mrf.mxu0
    %1502 = vmatprep.mubr.f32.mxu0 0.0
    %v1503 = vand.u32 %v185, 4294901760
    %1504 = vmatmul.mubr.f32.gmra.mxu0 %v1503
    %v1505 = vpop.f32.mrf.mxu0
    %v1506 = vadd.f32 %v1329, %v1505
    %v1507 = vpop.f32.mrf.mxu0
    %1508 = vmatprep.mubr.f32.mxu0 0.0
    %v1509 = vand.u32 %v188, 4294901760
    %1510 = vmatmul.mubr.f32.gmra.mxu0 %v1509
    %v1511 = vpop.f32.mrf.mxu0
    %v1512 = vadd.f32 %v1335, %v1511
    %v1513 = vpop.f32.mrf.mxu0
    %1514 = vmatprep.mubr.f32.mxu0 0.0
    %v1515 = vand.u32 %v191, 4294901760
    %1516 = vmatmul.mubr.f32.gmra.mxu0 %v1515
    %v1517 = vpop.f32.mrf.mxu0
    %v1518 = vadd.f32 %v1341, %v1517
    %v1519 = vpop.f32.mrf.mxu0
    %1520 = vmatprep.mubr.f32.mxu0 0.0
    %v1521 = vand.u32 %v194, 4294901760
    %1522 = vmatmul.mubr.f32.gmra.mxu0 %v1521
    %v1523 = vpop.f32.mrf.mxu0
    %v1524 = vadd.f32 %v1347, %v1523
    %v1525 = vpop.f32.mrf.mxu0
    %1526 = vmatprep.mubr.f32.mxu0 0.0
    %v1527 = vand.u32 %v197, 4294901760
    %1528 = vmatmul.mubr.f32.gmra.mxu0 %v1527
    %v1529 = vpop.f32.mrf.mxu0
    %v1530 = vadd.f32 %v1353, %v1529
    %v1531 = vpop.f32.mrf.mxu0
    %1532 = vdwg.mxu0
    %v1533 = vmax.f32 %v1440, 0.0
    %v1534 = vmax.f32 %v1446, 0.0
    %v1535 = vmax.f32 %v1452, 0.0
    %v1536 = vmax.f32 %v1458, 0.0
    %v1537 = vmax.f32 %v1464, 0.0
    %v1538 = vmax.f32 %v1470, 0.0
    %v1539 = vmax.f32 %v1476, 0.0
    %v1540 = vmax.f32 %v1482, 0.0
    %v1541 = vmax.f32 %v1488, 0.0
    %v1542 = vmax.f32 %v1494, 0.0
    %v1543 = vmax.f32 %v1500, 0.0
    %v1544 = vmax.f32 %v1506, 0.0
    %v1545 = vmax.f32 %v1512, 0.0
    %v1546 = vmax.f32 %v1518, 0.0
    %v1547 = vmax.f32 %v1524, 0.0
    %v1548 = vmax.f32 %v1530, 0.0
    %v1549 = vld [vmem:[%s3] sm:$0xff]
    %v1550 = vld [vmem:[%s3 + $0x8] sm:$0xff]
    %v1551 = vld [vmem:[%s3 + $0x10] sm:$0xff]
    %v1552 = vld [vmem:[%s3 + $0x18] sm:$0xff]
    %v1553 = vld [vmem:[%s3 + $0x20] sm:$0xff]
    %v1554 = vld [vmem:[%s3 + $0x28] sm:$0xff]
    %v1555 = vld [vmem:[%s3 + $0x30] sm:$0xff]
    %v1556 = vld [vmem:[%s3 + $0x38] sm:$0xff]
    %v1557 = vld [vmem:[%s3 + $0x40] sm:$0xff]
    %v1558 = vld [vmem:[%s3 + $0x48] sm:$0xff]
    %v1559 = vld [vmem:[%s3 + $0x50] sm:$0xff]
    %v1560 = vld [vmem:[%s3 + $0x58] sm:$0xff]
    %v1561 = vld [vmem:[%s3 + $0x60] sm:$0xff]
    %v1562 = vld [vmem:[%s3 + $0x68] sm:$0xff]
    %v1563 = vld [vmem:[%s3 + $0x70] sm:$0xff]
    %v1564 = vld [vmem:[%s3 + $0x78] sm:$0xff]
    %1566 = vset.pattern.permute.xlu0 0
    %1567 = vperm.xlu0 %1566, %v1549
    %v1568 = vpop.permute.xlu0 %1567
    %1571 = vset.pattern.permute.xlu0 0
    %1572 = vperm.xlu0 %1571, %v1550
    %v1573 = vpop.permute.xlu0 %1572
    %1576 = vset.pattern.permute.xlu0 0
    %1577 = vperm.xlu0 %1576, %v1551
    %v1578 = vpop.permute.xlu0 %1577
    %1581 = vset.pattern.permute.xlu0 0
    %1582 = vperm.xlu0 %1581, %v1552
    %v1583 = vpop.permute.xlu0 %1582
    %1586 = vset.pattern.permute.xlu0 0
    %1587 = vperm.xlu0 %1586, %v1553
    %v1588 = vpop.permute.xlu0 %1587
    %1591 = vset.pattern.permute.xlu0 0
    %1592 = vperm.xlu0 %1591, %v1554
    %v1593 = vpop.permute.xlu0 %1592
    %1596 = vset.pattern.permute.xlu0 0
    %1597 = vperm.xlu0 %1596, %v1555
    %v1598 = vpop.permute.xlu0 %1597
    %1601 = vset.pattern.permute.xlu0 0
    %1602 = vperm.xlu0 %1601, %v1556
    %v1603 = vpop.permute.xlu0 %1602
    %1606 = vset.pattern.permute.xlu0 0
    %1607 = vperm.xlu0 %1606, %v1557
    %v1608 = vpop.permute.xlu0 %1607
    %1611 = vset.pattern.permute.xlu0 0
    %1612 = vperm.xlu0 %1611, %v1558
    %v1613 = vpop.permute.xlu0 %1612
    %1616 = vset.pattern.permute.xlu0 0
    %1617 = vperm.xlu0 %1616, %v1559
    %v1618 = vpop.permute.xlu0 %1617
    %1621 = vset.pattern.permute.xlu0 0
    %1622 = vperm.xlu0 %1621, %v1560
    %v1623 = vpop.permute.xlu0 %1622
    %1626 = vset.pattern.permute.xlu0 0
    %1627 = vperm.xlu0 %1626, %v1561
    %v1628 = vpop.permute.xlu0 %1627
    %1631 = vset.pattern.permute.xlu0 0
    %1632 = vperm.xlu0 %1631, %v1562
    %v1633 = vpop.permute.xlu0 %1632
    %1636 = vset.pattern.permute.xlu0 0
    %1637 = vperm.xlu0 %1636, %v1563
    %v1638 = vpop.permute.xlu0 %1637
    %1641 = vset.pattern.permute.xlu0 0
    %1642 = vperm.xlu0 %1641, %v1564
    %v1643 = vpop.permute.xlu0 %1642
    %v1645 = vmul.f32 %v1533, %v1568
    %v1646 = vmul.f32 %v1534, %v1573
    %v1647 = vmul.f32 %v1535, %v1578
    %v1648 = vmul.f32 %v1536, %v1583
    %v1649 = vmul.f32 %v1537, %v1588
    %v1650 = vmul.f32 %v1538, %v1593
    %v1651 = vmul.f32 %v1539, %v1598
    %v1652 = vmul.f32 %v1540, %v1603
    %v1653 = vmul.f32 %v1541, %v1608
    %v1654 = vmul.f32 %v1542, %v1613
    %v1655 = vmul.f32 %v1543, %v1618
    %v1656 = vmul.f32 %v1544, %v1623
    %v1657 = vmul.f32 %v1545, %v1628
    %v1658 = vmul.f32 %v1546, %v1633
    %v1659 = vmul.f32 %v1547, %v1638
    %v1660 = vmul.f32 %v1548, %v1643
    %v1661 = vadd.f32 %v1645, %v1646
    %v1662 = vadd.f32 %v1661, %v1647
    %v1663 = vadd.f32 %v1662, %v1648
    %v1664 = vadd.f32 %v1663, %v1649
    %v1665 = vadd.f32 %v1664, %v1650
    %v1666 = vadd.f32 %v1665, %v1651
    %v1667 = vadd.f32 %v1666, %v1652
    %v1668 = vadd.f32 %v1667, %v1653
    %v1669 = vadd.f32 %v1668, %v1654
    %v1670 = vadd.f32 %v1669, %v1655
    %v1671 = vadd.f32 %v1670, %v1656
    %v1672 = vadd.f32 %v1671, %v1657
    %v1673 = vadd.f32 %v1672, %v1658
    %v1674 = vadd.f32 %v1673, %v1659
    %v1675 = vadd.f32 %v1674, %v1660
    %v1676 = vrot.slane %v1675, 4
    %v1677 = vadd.f32 %v1675, %v1676
    %v1678 = vrot.slane %v1677, 2
    %v1679 = vadd.f32 %v1677, %v1678
    %v1680 = vrot.slane %v1679, 1
    %v1681 = vadd.f32 %v1679, %v1680
    %s1682 = sld [smem:[#allocation2]]
    %v1683 = vstv %s1682
    %v1684 = vadd.f32 %v1681, %v1683
    %1685 = vst [vmem:[#allocation3] sm:$0x1] %v1684
    // Predicated region
    $region22: #{tpu_custom_call.1} parent=1 // pred_check
      _
    $region23: #{tpu_custom_call.1} parent=1 // pred_check_branch
      %1687 = sbr.rel (0) target = $region25
    $region24: #{tpu_custom_call.1} parent=1 // pred_region
      %s1689 = ssub.s32 16, 16
      %1690 = vsyncadd [#allocation4], %s1689
      %s1692 = sshll.u32 [#allocation3], 4
      %s1693 = int_to_ptr.vmem [resolvable:$true] %s1692
      %1695 = dma.vmem_to_hbm [thread:$0]  %s1693, 16, %s5, [#allocation4]
    $region25: #{tpu_custom_call.1} parent=1 // pred_fallthru
      _
    // Predicated region
    $region26: #{tpu_custom_call.1} parent=1 // pred_check
      _
    $region27: #{tpu_custom_call.1} parent=1 // pred_check_branch
      %1697 = sbr.rel (0) target = $region29
    $region28: #{tpu_custom_call.1} parent=1 // pred_region
      %1698 = dma.done [#allocation4], 16
    $region29: #{tpu_custom_call.1} parent=1 // pred_fallthru
      _
    %1699 = vsyncpa [#allocation4], 1

// kernel: tpu_custom_call.1
$region0: #{tpu_custom_call.1}
  #allocation0 [shape = 'u32[]', space=smem, size = 0x4, offset = 0x4, fixed_abs, tag = 'smem constant byte address 0x4 - core index']
  #allocation1 [shape = 'u32[144,128]{1,0:T(1,128)}', space=vmem, size = 0x12000, scoped, tag = 'internal scratch']
  #allocation2 [shape = 'f32[1,1]{1,0:T(1,128)S(6)}', space=smem, size = 0x200, scoped, tag = 'scoped memory for tpu_custom_call.1']
  %s0 = inlined_call_operand.vmem [shape: f32[128,32], index: 0, kind: input, shape index: {}]
  %s1 = inlined_call_operand.vmem [shape: f32[128,32], index: 1, kind: input, shape index: {}]
  %s2 = inlined_call_operand.vmem [shape: f32[128,1], index: 2, kind: input, shape index: {}]
  %s3 = inlined_call_operand.vmem [shape: f32[128,1], index: 3, kind: input, shape index: {}]
  %s4 = inlined_call_operand.<no memory space> [shape: f32[1,1], index: 4, kind: input, shape index: {}]
  %s5 = inlined_call_operand.hbm [shape: f32[1,128], index: 5, kind: output, shape index: {}]
  %s6 = sld [smem:[#allocation0]]
  $region30: #{tpu_custom_call.1} parent=0
    _
  %s8 = ssub.s32 1, %s6
  %s9 = scalar_select 0, %s8, %s6
  %10 = sst [smem:[#allocation2]] %s4
  $region1: #{tpu_custom_call.1} parent=0
    #allocation3 [shape = 'u8[512]{0}', space=vmem, size = 0x400, scoped, tag = 'output window, operand 0, single buffered']
    #allocation4 [shape = 's32[1]{0}', space=sflag, size = 0x4, scoped, tag = 'scoped memory for tpu_custom_call.1']
    %11 = vsyncpa [#allocation4], 0
    // Predicated region
    $region2: #{tpu_custom_call.1} parent=1 // pred_check
      _
    $region3: #{tpu_custom_call.1} parent=1 // pred_check_branch
      %13 = sbr.rel (0) target = $region5
    $region4: #{tpu_custom_call.1} parent=1 // pred_region
      _
    $region5: #{tpu_custom_call.1} parent=1 // pred_fallthru
      _
    // Predicated region
    $region6: #{tpu_custom_call.1} parent=1 // pred_check
      _
    $region7: #{tpu_custom_call.1} parent=1 // pred_check_branch
      %15 = sbr.rel (0) target = $region9
    $region8: #{tpu_custom_call.1} parent=1 // pred_region
      _
    $region9: #{tpu_custom_call.1} parent=1 // pred_fallthru
      _
    // Predicated region
    $region10: #{tpu_custom_call.1} parent=1 // pred_check
      _
    $region11: #{tpu_custom_call.1} parent=1 // pred_check_branch
      %17 = sbr.rel (0) target = $region13
    $region12: #{tpu_custom_call.1} parent=1 // pred_region
      _
    $region13: #{tpu_custom_call.1} parent=1 // pred_fallthru
      _
    // Predicated region
    $region14: #{tpu_custom_call.1} parent=1 // pred_check
      _
    $region15: #{tpu_custom_call.1} parent=1 // pred_check_branch
      %19 = sbr.rel (0) target = $region17
    $region16: #{tpu_custom_call.1} parent=1 // pred_region
      _
    $region17: #{tpu_custom_call.1} parent=1 // pred_fallthru
      _
    // Predicated region
    $region18: #{tpu_custom_call.1} parent=1 // pred_check
      _
    $region19: #{tpu_custom_call.1} parent=1 // pred_check_branch
      %21 = sbr.rel (0) target = $region21
    $region20: #{tpu_custom_call.1} parent=1 // pred_region
      _
    $region21: #{tpu_custom_call.1} parent=1 // pred_fallthru
      _
    %v22 = vld [vmem:[%s1] sm:$0xff]
    %v23 = vld [vmem:[%s1 + $0x8] sm:$0xff]
    %v24 = vld [vmem:[%s1 + $0x10] sm:$0xff]
    %v25 = vld [vmem:[%s1 + $0x18] sm:$0xff]
    %v26 = vld [vmem:[%s1 + $0x20] sm:$0xff]
    %v27 = vld [vmem:[%s1 + $0x28] sm:$0xff]
    %v28 = vld [vmem:[%s1 + $0x30] sm:$0xff]
    %v29 = vld [vmem:[%s1 + $0x38] sm:$0xff]
    %v30 = vld [vmem:[%s1 + $0x40] sm:$0xff]
    %v31 = vld [vmem:[%s1 + $0x48] sm:$0xff]
    %v32 = vld [vmem:[%s1 + $0x50] sm:$0xff]
    %v33 = vld [vmem:[%s1 + $0x58] sm:$0xff]
    %v34 = vld [vmem:[%s1 + $0x60] sm:$0xff]
    %v35 = vld [vmem:[%s1 + $0x68] sm:$0xff]
    %v36 = vld [vmem:[%s1 + $0x70] sm:$0xff]
    %v37 = vld [vmem:[%s1 + $0x78] sm:$0xff]
    %v38 = vld [vmem:[%s0] sm:$0xff]
    %v39 = vld [vmem:[%s0 + $0x8] sm:$0xff]
    %v40 = vld [vmem:[%s0 + $0x10] sm:$0xff]
    %v41 = vld [vmem:[%s0 + $0x18] sm:$0xff]
    %v42 = vld [vmem:[%s0 + $0x20] sm:$0xff]
    %v43 = vld [vmem:[%s0 + $0x28] sm:$0xff]
    %v44 = vld [vmem:[%s0 + $0x30] sm:$0xff]
    %v45 = vld [vmem:[%s0 + $0x38] sm:$0xff]
    %v46 = vld [vmem:[%s0 + $0x40] sm:$0xff]
    %v47 = vld [vmem:[%s0 + $0x48] sm:$0xff]
    %v48 = vld [vmem:[%s0 + $0x50] sm:$0xff]
    %v49 = vld [vmem:[%s0 + $0x58] sm:$0xff]
    %v50 = vld [vmem:[%s0 + $0x60] sm:$0xff]
    %v51 = vld [vmem:[%s0 + $0x68] sm:$0xff]
    %v52 = vld [vmem:[%s0 + $0x70] sm:$0xff]
    %v53 = vld [vmem:[%s0 + $0x78] sm:$0xff]
    %v54 = vld [vmem:[%s2] sm:$0xff]
    %v55 = vld [vmem:[%s2 + $0x8] sm:$0xff]
    %v56 = vld [vmem:[%s2 + $0x10] sm:$0xff]
    %v57 = vld [vmem:[%s2 + $0x18] sm:$0xff]
    %v58 = vld [vmem:[%s2 + $0x20] sm:$0xff]
    %v59 = vld [vmem:[%s2 + $0x28] sm:$0xff]
    %v60 = vld [vmem:[%s2 + $0x30] sm:$0xff]
    %v61 = vld [vmem:[%s2 + $0x38] sm:$0xff]
    %v62 = vld [vmem:[%s2 + $0x40] sm:$0xff]
    %v63 = vld [vmem:[%s2 + $0x48] sm:$0xff]
    %v64 = vld [vmem:[%s2 + $0x50] sm:$0xff]
    %v65 = vld [vmem:[%s2 + $0x58] sm:$0xff]
    %v66 = vld [vmem:[%s2 + $0x60] sm:$0xff]
    %v67 = vld [vmem:[%s2 + $0x68] sm:$0xff]
    %v68 = vld [vmem:[%s2 + $0x70] sm:$0xff]
    %v69 = vld [vmem:[%s2 + $0x78] sm:$0xff]
    %71 = vset.pattern.permute.xlu0 0
    %72 = vperm.xlu0 %71, %v54
    %v73 = vpop.permute.xlu0 %72
    %76 = vset.pattern.permute.xlu0 0
    %77 = vperm.xlu0 %76, %v55
    %v78 = vpop.permute.xlu0 %77
    %81 = vset.pattern.permute.xlu0 0
    %82 = vperm.xlu0 %81, %v56
    %v83 = vpop.permute.xlu0 %82
    %86 = vset.pattern.permute.xlu0 0
    %87 = vperm.xlu0 %86, %v57
    %v88 = vpop.permute.xlu0 %87
    %91 = vset.pattern.permute.xlu0 0
    %92 = vperm.xlu0 %91, %v58
    %v93 = vpop.permute.xlu0 %92
    %96 = vset.pattern.permute.xlu0 0
    %97 = vperm.xlu0 %96, %v59
    %v98 = vpop.permute.xlu0 %97
    %101 = vset.pattern.permute.xlu0 0
    %102 = vperm.xlu0 %101, %v60
    %v103 = vpop.permute.xlu0 %102
    %106 = vset.pattern.permute.xlu0 0
    %107 = vperm.xlu0 %106, %v61
    %v108 = vpop.permute.xlu0 %107
    %111 = vset.pattern.permute.xlu0 0
    %112 = vperm.xlu0 %111, %v62
    %v113 = vpop.permute.xlu0 %112
    %116 = vset.pattern.permute.xlu0 0
    %117 = vperm.xlu0 %116, %v63
    %v118 = vpop.permute.xlu0 %117
    %121 = vset.pattern.permute.xlu0 0
    %122 = vperm.xlu0 %121, %v64
    %v123 = vpop.permute.xlu0 %122
    %126 = vset.pattern.permute.xlu0 0
    %127 = vperm.xlu0 %126, %v65
    %v128 = vpop.permute.xlu0 %127
    %131 = vset.pattern.permute.xlu0 0
    %132 = vperm.xlu0 %131, %v66
    %v133 = vpop.permute.xlu0 %132
    %136 = vset.pattern.permute.xlu0 0
    %137 = vperm.xlu0 %136, %v67
    %v138 = vpop.permute.xlu0 %137
    %141 = vset.pattern.permute.xlu0 0
    %142 = vperm.xlu0 %141, %v68
    %v143 = vpop.permute.xlu0 %142
    %146 = vset.pattern.permute.xlu0 0
    %147 = vperm.xlu0 %146, %v69
    %v148 = vpop.permute.xlu0 %147
    %vm150 = vcmask 261120
    %v152 = vsel %vm150, %v22, 0
    %v155 = vsel %vm150, %v23, 0
    %v158 = vsel %vm150, %v24, 0
    %v161 = vsel %vm150, %v25, 0
    %v164 = vsel %vm150, %v26, 0
    %v167 = vsel %vm150, %v27, 0
    %v170 = vsel %vm150, %v28, 0
    %v173 = vsel %vm150, %v29, 0
    %v176 = vsel %vm150, %v30, 0
    %v179 = vsel %vm150, %v31, 0
    %v182 = vsel %vm150, %v32, 0
    %v185 = vsel %vm150, %v33, 0
    %v188 = vsel %vm150, %v34, 0
    %v191 = vsel %vm150, %v35, 0
    %v194 = vsel %vm150, %v36, 0
    %v197 = vsel %vm150, %v37, 0
    %v200 = vsel %vm150, %v38, 0
    %v203 = vsel %vm150, %v39, 0
    %v206 = vsel %vm150, %v40, 0
    %v209 = vsel %vm150, %v41, 0
    %v212 = vsel %vm150, %v42, 0
    %v215 = vsel %vm150, %v43, 0
    %v218 = vsel %vm150, %v44, 0
    %v221 = vsel %vm150, %v45, 0
    %v224 = vsel %vm150, %v46, 0
    %v227 = vsel %vm150, %v47, 0
    %v230 = vsel %vm150, %v48, 0
    %v233 = vsel %vm150, %v49, 0
    %v236 = vsel %vm150, %v50, 0
    %v239 = vsel %vm150, %v51, 0
    %v242 = vsel %vm150, %v52, 0
    %v245 = vsel %vm150, %v53, 0
    %247 = vmatprep.subr.mxu0 0.0
    %248 = vmatpush1.xpose.msra.mxu0 %v245
    %249 = vmatprep.subr.mxu0 0.0
    %250 = vmatpush1.xpose.msra.mxu0 %v242
    %251 = vmatprep.subr.mxu0 0.0
    %252 = vmatpush1.xpose.msra.mxu0 %v239
    %253 = vmatprep.subr.mxu0 0.0
    %254 = vmatpush1.xpose.msra.mxu0 %v236
    %255 = vmatprep.subr.mxu0 0.0
    %256 = vmatpush1.xpose.msra.mxu0 %v233
    %257 = vmatprep.subr.mxu0 0.0
    %258 = vmatpush1.xpose.msra.mxu0 %v230
    %259 = vmatprep.subr.mxu0 0.0
    %260 = vmatpush1.xpose.msra.mxu0 %v227
    %261 = vmatprep.subr.mxu0 0.0
    %262 = vmatpush1.xpose.msra.mxu0 %v224
    %263 = vmatprep.subr.mxu0 0.0
    %264 = vmatpush1.xpose.msra.mxu0 %v221
    %265 = vmatprep.subr.mxu0 0.0
    %266 = vmatpush1.xpose.msra.mxu0 %v218
    %267 = vmatprep.subr.mxu0 0.0
    %268 = vmatpush1.xpose.msra.mxu0 %v215
    %269 = vmatprep.subr.mxu0 0.0
    %270 = vmatpush1.xpose.msra.mxu0 %v212
    %271 = vmatprep.subr.mxu0 0.0
    %272 = vmatpush1.xpose.msra.mxu0 %v209
    %273 = vmatprep.subr.mxu0 0.0
    %274 = vmatpush1.xpose.msra.mxu0 %v206
    %275 = vmatprep.subr.mxu0 0.0
    %276 = vmatpush1.xpose.msra.mxu0 %v203
    %277 = vmatprep.subr.mxu0 0.0
    %278 = vmatpush1.xpose.msra.mxu0 %v200
    %279 = vmatprep.subr.mxu0 0.0
    %280 = vmatpush2.xpose.msra.mxu0 0.0
    %281 = vmatprep.subr.mxu0 0.0
    %282 = vmatpush2.xpose.msra.mxu0 0.0
    %283 = vmatprep.subr.mxu0 0.0
    %284 = vmatpush2.xpose.msra.mxu0 0.0
    %285 = vmatprep.subr.mxu0 0.0
    %286 = vmatpush2.xpose.msra.mxu0 0.0
    %287 = vmatprep.subr.mxu0 0.0
    %288 = vmatpush2.xpose.msra.mxu0 0.0
    %289 = vmatprep.subr.mxu0 0.0
    %290 = vmatpush2.xpose.msra.mxu0 0.0
    %291 = vmatprep.subr.mxu0 0.0
    %292 = vmatpush2.xpose.msra.mxu0 0.0
    %293 = vmatprep.subr.mxu0 0.0
    %294 = vmatpush2.xpose.msra.mxu0 0.0
    %295 = vmatprep.subr.mxu0 0.0
    %296 = vmatpush2.xpose.msra.mxu0 0.0
    %297 = vmatprep.subr.mxu0 0.0
    %298 = vmatpush2.xpose.msra.mxu0 0.0
    %299 = vmatprep.subr.mxu0 0.0
    %300 = vmatpush2.xpose.msra.mxu0 0.0
    %301 = vmatprep.subr.mxu0 0.0
    %302 = vmatpush2.xpose.msra.mxu0 0.0
    %303 = vmatprep.subr.mxu0 0.0
    %304 = vmatpush2.xpose.msra.mxu0 0.0
    %305 = vmatprep.subr.mxu0 0.0
    %306 = vmatpush2.xpose.msra.mxu0 0.0
    %307 = vmatprep.subr.mxu0 0.0
    %308 = vmatpush2.xpose.msra.mxu0 0.0
    %309 = vmatprep.subr.mxu0 0.0
    %310 = vmatpush2.xpose.msra.mxu0 0.0
    %311 = vmatprep.mubr.f32.mxu0 0.0
    %312 = vmatmul.mubr.f32.gmra.mxu0 %v152
    %v313 = vpop.f32.mrf.mxu0
    %v314 = vadd.f32 %v73, %v313
    %v315 = vpop.f32.mrf.mxu0
    %316 = vmatprep.mubr.f32.mxu0 0.0
    %317 = vmatmul.mubr.f32.gmra.mxu0 %v155
    %v318 = vpop.f32.mrf.mxu0
    %v319 = vadd.f32 %v78, %v318
    %v320 = vpop.f32.mrf.mxu0
    %321 = vmatprep.mubr.f32.mxu0 0.0
    %322 = vmatmul.mubr.f32.gmra.mxu0 %v158
    %v323 = vpop.f32.mrf.mxu0
    %v324 = vadd.f32 %v83, %v323
    %v325 = vpop.f32.mrf.mxu0
    %326 = vmatprep.mubr.f32.mxu0 0.0
    %327 = vmatmul.mubr.f32.gmra.mxu0 %v161
    %v328 = vpop.f32.mrf.mxu0
    %v329 = vadd.f32 %v88, %v328
    %v330 = vpop.f32.mrf.mxu0
    %331 = vmatprep.mubr.f32.mxu0 0.0
    %332 = vmatmul.mubr.f32.gmra.mxu0 %v164
    %v333 = vpop.f32.mrf.mxu0
    %v334 = vadd.f32 %v93, %v333
    %v335 = vpop.f32.mrf.mxu0
    %336 = vmatprep.mubr.f32.mxu0 0.0
    %337 = vmatmul.mubr.f32.gmra.mxu0 %v167
    %v338 = vpop.f32.mrf.mxu0
    %v339 = vadd.f32 %v98, %v338
    %v340 = vpop.f32.mrf.mxu0
    %341 = vmatprep.mubr.f32.mxu0 0.0
    %342 = vmatmul.mubr.f32.gmra.mxu0 %v170
    %v343 = vpop.f32.mrf.mxu0
    %v344 = vadd.f32 %v103, %v343
    %v345 = vpop.f32.mrf.mxu0
    %346 = vmatprep.mubr.f32.mxu0 0.0
    %347 = vmatmul.mubr.f32.gmra.mxu0 %v173
    %v348 = vpop.f32.mrf.mxu0
    %v349 = vadd.f32 %v108, %v348
    %v350 = vpop.f32.mrf.mxu0
    %351 = vmatprep.mubr.f32.mxu0 0.0
    %352 = vmatmul.mubr.f32.gmra.mxu0 %v176
    %v353 = vpop.f32.mrf.mxu0
    %v354 = vadd.f32 %v113, %v353
    %v355 = vpop.f32.mrf.mxu0
    %356 = vmatprep.mubr.f32.mxu0 0.0
    %357 = vmatmul.mubr.f32.gmra.mxu0 %v179
    %v358 = vpop.f32.mrf.mxu0
    %v359 = vadd.f32 %v118, %v358
    %v360 = vpop.f32.mrf.mxu0
    %361 = vmatprep.mubr.f32.mxu0 0.0
    %362 = vmatmul.mubr.f32.gmra.mxu0 %v182
    %v363 = vpop.f32.mrf.mxu0
    %v364 = vadd.f32 %v123, %v363
    %v365 = vpop.f32.mrf.mxu0
    %366 = vmatprep.mubr.f32.mxu0 0.0
    %367 = vmatmul.mubr.f32.gmra.mxu0 %v185
    %v368 = vpop.f32.mrf.mxu0
    %v369 = vadd.f32 %v128, %v368
    %v370 = vpop.f32.mrf.mxu0
    %371 = vmatprep.mubr.f32.mxu0 0.0
    %372 = vmatmul.mubr.f32.gmra.mxu0 %v188
    %v373 = vpop.f32.mrf.mxu0
    %v374 = vadd.f32 %v133, %v373
    %v375 = vpop.f32.mrf.mxu0
    %376 = vmatprep.mubr.f32.mxu0 0.0
    %377 = vmatmul.mubr.f32.gmra.mxu0 %v191
    %v378 = vpop.f32.mrf.mxu0
    %v379 = vadd.f32 %v138, %v378
    %v380 = vpop.f32.mrf.mxu0
    %381 = vmatprep.mubr.f32.mxu0 0.0
    %382 = vmatmul.mubr.f32.gmra.mxu0 %v194
    %v383 = vpop.f32.mrf.mxu0
    %v384 = vadd.f32 %v143, %v383
    %v385 = vpop.f32.mrf.mxu0
    %386 = vmatprep.mubr.f32.mxu0 0.0
    %387 = vmatmul.mubr.f32.gmra.mxu0 %v197
    %v388 = vpop.f32.mrf.mxu0
    %v389 = vadd.f32 %v148, %v388
    %v390 = vpop.f32.mrf.mxu0
    %391 = vdwg.mxu0
    %v392 = vmax.f32 %v314, 0.0
    %v393 = vmax.f32 %v319, 0.0
    %v394 = vmax.f32 %v324, 0.0
    %v395 = vmax.f32 %v329, 0.0
    %v396 = vmax.f32 %v334, 0.0
    %v397 = vmax.f32 %v339, 0.0
    %v398 = vmax.f32 %v344, 0.0
    %v399 = vmax.f32 %v349, 0.0
    %v400 = vmax.f32 %v354, 0.0
    %v401 = vmax.f32 %v359, 0.0
    %v402 = vmax.f32 %v364, 0.0
    %v403 = vmax.f32 %v369, 0.0
    %v404 = vmax.f32 %v374, 0.0
    %v405 = vmax.f32 %v379, 0.0
    %v406 = vmax.f32 %v384, 0.0
    %v407 = vmax.f32 %v389, 0.0
    %v408 = vld [vmem:[%s3] sm:$0xff]
    %v409 = vld [vmem:[%s3 + $0x8] sm:$0xff]
    %v410 = vld [vmem:[%s3 + $0x10] sm:$0xff]
    %v411 = vld [vmem:[%s3 + $0x18] sm:$0xff]
    %v412 = vld [vmem:[%s3 + $0x20] sm:$0xff]
    %v413 = vld [vmem:[%s3 + $0x28] sm:$0xff]
    %v414 = vld [vmem:[%s3 + $0x30] sm:$0xff]
    %v415 = vld [vmem:[%s3 + $0x38] sm:$0xff]
    %v416 = vld [vmem:[%s3 + $0x40] sm:$0xff]
    %v417 = vld [vmem:[%s3 + $0x48] sm:$0xff]
    %v418 = vld [vmem:[%s3 + $0x50] sm:$0xff]
    %v419 = vld [vmem:[%s3 + $0x58] sm:$0xff]
    %v420 = vld [vmem:[%s3 + $0x60] sm:$0xff]
    %v421 = vld [vmem:[%s3 + $0x68] sm:$0xff]
    %v422 = vld [vmem:[%s3 + $0x70] sm:$0xff]
    %v423 = vld [vmem:[%s3 + $0x78] sm:$0xff]
    %425 = vset.pattern.permute.xlu0 0
    %426 = vperm.xlu0 %425, %v408
    %v427 = vpop.permute.xlu0 %426
    %430 = vset.pattern.permute.xlu0 0
    %431 = vperm.xlu0 %430, %v409
    %v432 = vpop.permute.xlu0 %431
    %435 = vset.pattern.permute.xlu0 0
    %436 = vperm.xlu0 %435, %v410
    %v437 = vpop.permute.xlu0 %436
    %440 = vset.pattern.permute.xlu0 0
    %441 = vperm.xlu0 %440, %v411
    %v442 = vpop.permute.xlu0 %441
    %445 = vset.pattern.permute.xlu0 0
    %446 = vperm.xlu0 %445, %v412
    %v447 = vpop.permute.xlu0 %446
    %450 = vset.pattern.permute.xlu0 0
    %451 = vperm.xlu0 %450, %v413
    %v452 = vpop.permute.xlu0 %451
    %455 = vset.pattern.permute.xlu0 0
    %456 = vperm.xlu0 %455, %v414
    %v457 = vpop.permute.xlu0 %456
    %460 = vset.pattern.permute.xlu0 0
    %461 = vperm.xlu0 %460, %v415
    %v462 = vpop.permute.xlu0 %461
    %465 = vset.pattern.permute.xlu0 0
    %466 = vperm.xlu0 %465, %v416
    %v467 = vpop.permute.xlu0 %466
    %470 = vset.pattern.permute.xlu0 0
    %471 = vperm.xlu0 %470, %v417
    %v472 = vpop.permute.xlu0 %471
    %475 = vset.pattern.permute.xlu0 0
    %476 = vperm.xlu0 %475, %v418
    %v477 = vpop.permute.xlu0 %476
    %480 = vset.pattern.permute.xlu0 0
    %481 = vperm.xlu0 %480, %v419
    %v482 = vpop.permute.xlu0 %481
    %485 = vset.pattern.permute.xlu0 0
    %486 = vperm.xlu0 %485, %v420
    %v487 = vpop.permute.xlu0 %486
    %490 = vset.pattern.permute.xlu0 0
    %491 = vperm.xlu0 %490, %v421
    %v492 = vpop.permute.xlu0 %491
    %495 = vset.pattern.permute.xlu0 0
    %496 = vperm.xlu0 %495, %v422
    %v497 = vpop.permute.xlu0 %496
    %500 = vset.pattern.permute.xlu0 0
    %501 = vperm.xlu0 %500, %v423
    %v502 = vpop.permute.xlu0 %501
    %v504 = vmul.f32 %v392, %v427
    %v505 = vmul.f32 %v393, %v432
    %v506 = vmul.f32 %v394, %v437
    %v507 = vmul.f32 %v395, %v442
    %v508 = vmul.f32 %v396, %v447
    %v509 = vmul.f32 %v397, %v452
    %v510 = vmul.f32 %v398, %v457
    %v511 = vmul.f32 %v399, %v462
    %v512 = vmul.f32 %v400, %v467
    %v513 = vmul.f32 %v401, %v472
    %v514 = vmul.f32 %v402, %v477
    %v515 = vmul.f32 %v403, %v482
    %v516 = vmul.f32 %v404, %v487
    %v517 = vmul.f32 %v405, %v492
    %v518 = vmul.f32 %v406, %v497
    %v519 = vmul.f32 %v407, %v502
    %v520 = vadd.f32 %v504, %v505
    %v521 = vadd.f32 %v520, %v506
    %v522 = vadd.f32 %v521, %v507
    %v523 = vadd.f32 %v522, %v508
    %v524 = vadd.f32 %v523, %v509
    %v525 = vadd.f32 %v524, %v510
    %v526 = vadd.f32 %v525, %v511
    %v527 = vadd.f32 %v526, %v512
    %v528 = vadd.f32 %v527, %v513
    %v529 = vadd.f32 %v528, %v514
    %v530 = vadd.f32 %v529, %v515
    %v531 = vadd.f32 %v530, %v516
    %v532 = vadd.f32 %v531, %v517
    %v533 = vadd.f32 %v532, %v518
    %v534 = vadd.f32 %v533, %v519
    %v535 = vrot.slane %v534, 4
    %v536 = vadd.f32 %v534, %v535
    %v537 = vrot.slane %v536, 2
    %v538 = vadd.f32 %v536, %v537
    %v539 = vrot.slane %v538, 1
    %v540 = vadd.f32 %v538, %v539
    %s541 = sld [smem:[#allocation2]]
    %v542 = vstv %s541
    %v543 = vadd.f32 %v540, %v542
    %544 = vst [vmem:[#allocation3] sm:$0x1] %v543
    // Predicated region
    $region22: #{tpu_custom_call.1} parent=1 // pred_check
      _
    $region23: #{tpu_custom_call.1} parent=1 // pred_check_branch
      %546 = sbr.rel (0) target = $region25
    $region24: #{tpu_custom_call.1} parent=1 // pred_region
      %s548 = ssub.s32 16, 16
      %549 = vsyncadd [#allocation4], %s548
      %s551 = sshll.u32 [#allocation3], 4
      %s552 = int_to_ptr.vmem [resolvable:$true] %s551
      %554 = dma.vmem_to_hbm [thread:$0]  %s552, 16, %s5, [#allocation4]
    $region25: #{tpu_custom_call.1} parent=1 // pred_fallthru
      _
    // Predicated region
    $region26: #{tpu_custom_call.1} parent=1 // pred_check
      _
    $region27: #{tpu_custom_call.1} parent=1 // pred_check_branch
      %556 = sbr.rel (0) target = $region29
    $region28: #{tpu_custom_call.1} parent=1 // pred_region
      %557 = dma.done [#allocation4], 16
    $region29: #{tpu_custom_call.1} parent=1 // pred_fallthru
      _
    %558 = vsyncpa [#allocation4], 1

</llo_original>
